<compile_context>
chip_gen: v6e
topology: v6e:2x2x1
jax: 0.10.0
libtpu: 0.0.40
codegen_flags: <defaults>
</compile_context>

<pallas_src>
import functools

import jax
import jax.numpy as jnp
from jax.experimental import pallas as pl
from jax.experimental.pallas import tpu as pltpu


def _cdiv(a, b):
    return -(-a // b)


def _round_up(a, b):
    return _cdiv(a, b) * b


_TILE_CANDIDATES = (16384, 8192, 4096, 2048, 1024, 512, 256, 128)
_VMEM_TILE_BUDGET = 16 * 1024 * 1024     # bytes allowed for lane-tiled blocks
_VMEM_LIMIT_BYTES = 32 * 1024 * 1024     # explicit scoped-VMEM limit (safe v5e..v7x)


def _tpu_flavor():
    """(tensorcores_per_device, has_bf16_eup) inferred from the device kind."""
    try:
        kind = jax.devices()[0].device_kind.lower()
    except Exception:
        kind = ""
    single_tc = any(t in kind for t in ("v2", "v3", "lite", "v5e", "v6e"))
    multi_tc = any(t in kind for t in ("v4", "v5p", "v7"))
    n_cores = 2 if (multi_tc and not single_tc) else 1
    has_bf16_eup = ("v6" in kind) or ("v7" in kind)
    return n_cores, has_bf16_eup


def _pick_tile(n, bytes_per_lane, *, n_cores, vmem_budget=_VMEM_TILE_BUDGET):
    """Pick the lane tile (multiple of 128) minimizing bytes + per-step pipeline
    overhead (~0.35us/step) under a VMEM budget. On megacore chips the grid is
    rounded up to a multiple of n_cores so both TensorCores get equal work.
    Returns (tile, padded_length)."""
    overhead_lanes = max(1, int(0.35e-6 * 1.0e12 / max(bytes_per_lane, 1)))
    best = None
    for t in _TILE_CANDIDATES:                       # descending
        if t * bytes_per_lane > vmem_budget:
            continue
        steps = _cdiv(n, t)
        if n_cores > 1 and steps > 1:
            steps = _round_up(steps, n_cores)
        cost = steps * (t + overhead_lanes)
        if best is None or cost < best[0]:
            best = (cost, t, steps)
    if best is None:                                 # nothing fits: smallest tile
        t = _TILE_CANDIDATES[-1]
        steps = _cdiv(n, t)
        if n_cores > 1 and steps > 1:
            steps = _round_up(steps, n_cores)
        best = (0, t, steps)
    _, tile, steps = best
    return tile, tile * steps


# ----------------------------------------------------------------------------
# Pallas kernel 1: in-kernel c0 gather (one-hot routing matmul) + complex
# pointwise multiply in Fourier space; packed real/imag in & out.
#   P_k = K_k * W_{c0[k]}   per Lenia kernel, per rfft bin.
# ----------------------------------------------------------------------------
def _fourier_gather_mul_kernel(kf_ref, wf_ref, g_ref, out_ref):
    kr = kf_ref[0]                                                 # (nk1, T)
    ki = kf_ref[1]
    wr = wf_ref[0]                                                 # (C, T)
    wi = wf_ref[1]
    g = g_ref[...]                                                 # (nk1, C) one-hot c0
    wr_g = jnp.dot(g, wr, preferred_element_type=jnp.float32)      # gathered world fft
    wi_g = jnp.dot(g, wi, preferred_element_type=jnp.float32)
    out_ref[0] = kr * wr_g - ki * wi_g                             # real
    out_ref[1] = kr * wi_g + ki * wr_g                             # imag


def fourier_gather_mul(kf, wf, g, *, tile):
    _, nk1, npad = kf.shape
    c = wf.shape[1]
    assert npad % tile == 0
    grid = (npad // tile,)
    return pl.pallas_call(
        _fourier_gather_mul_kernel,
        out_shape=jax.ShapeDtypeStruct((2, nk1, npad), jnp.float32),
        grid_spec=pltpu.PrefetchScalarGridSpec(
            num_scalar_prefetch=0,
            grid=grid,
            in_specs=[
                pl.BlockSpec((2, nk1, tile), lambda i: (0, 0, i)),  # kernel fft (re, im)
                pl.BlockSpec((2, c, tile), lambda i: (0, 0, i)),    # world fft (re, im)
                pl.BlockSpec((nk1, c), lambda i: (0, 0)),           # one-hot c0 routing
            ],
            out_specs=pl.BlockSpec((2, nk1, tile), lambda i: (0, 0, i)),
        ),
        compiler_params=pltpu.CompilerParams(
            dimension_semantics=("parallel",),
            vmem_limit_bytes=_VMEM_LIMIT_BYTES),
    )(kf, wf, g)


# ----------------------------------------------------------------------------
# Pallas kernel 2: growth + wall + per-channel accumulation + state update.
#   efield_k   = exp((pot_k - m_k)^2 * neg_inv_2s2_k)        (rows 0..nb_k-1)
#   field_wall = -clip(pot_wall - 1e-8, 0, 1) * 10           (last row, via iota select)
#   D_c        = sum_k W2e[c,k] * field_k + bias_c           (W2e last column = wmask/T)
#   out_c      = clip(state_c + D_c, 0, 1)
# ----------------------------------------------------------------------------
def _lenia_update_kernel(pot_ref, state_ref, m_ref, ninv_ref, w2_ref, bias_ref,
                         out_ref, *, use_bf16):
    pot = pot_ref[...]                                             # (nk1, T)
    d = pot - m_ref[...]
    arg = d * d * ninv_ref[...]
    if use_bf16:
        # bf16 EUP (v6e/v7x): ~2x exp throughput; accumulate back in f32.
        efield = jnp.exp(arg.astype(jnp.bfloat16)).astype(jnp.float32)
    else:
        efield = jnp.exp(arg)
    wallf = -jnp.clip(pot - 1e-8, 0.0, 1.0) * 10.0                 # only last row used
    row = jax.lax.broadcasted_iota(jnp.int32, pot.shape, 0)
    field = jnp.where(row < pot.shape[0] - 1, efield, wallf)       # wall row selected
    growth = jnp.dot(w2_ref[...], field,
                     preferred_element_type=jnp.float32)           # (C, T) tiny matmul
    out_ref[...] = jnp.clip(state_ref[...] + growth + bias_ref[...], 0.0, 1.0)


def lenia_update(pot, state_cf, m_b, ninv_b, w2e, bias_b, *, tile, use_bf16):
    nk1, npad = pot.shape
    c = state_cf.shape[0]
    assert npad % tile == 0
    grid = (npad // tile,)
    kernel = functools.partial(_lenia_update_kernel, use_bf16=use_bf16)
    return pl.pallas_call(
        kernel,
        out_shape=jax.ShapeDtypeStruct((c, npad), jnp.float32),
        grid_spec=pltpu.PrefetchScalarGridSpec(
            num_scalar_prefetch=0,
            grid=grid,
            in_specs=[
                pl.BlockSpec((nk1, tile), lambda i: (0, i)),   # potentials (incl. wall row)
                pl.BlockSpec((c, tile), lambda i: (0, i)),     # current state
                pl.BlockSpec((nk1, tile), lambda i: (0, 0)),   # m   (lane-broadcast, resident)
                pl.BlockSpec((nk1, tile), lambda i: (0, 0)),   # -1/(2 s^2)
                pl.BlockSpec((c, nk1), lambda i: (0, 0)),      # W2e = [2*h*route/T | wmask/T]
                pl.BlockSpec((c, tile), lambda i: (0, 0)),     # bias = -sum_k W
            ],
            out_specs=pl.BlockSpec((c, tile), lambda i: (0, i)),
        ),
        # new state reuses the old state buffer (same block index per step).
        input_output_aliases={1: 0},
        compiler_params=pltpu.CompilerParams(
            dimension_semantics=("parallel",),
            vmem_limit_bytes=_VMEM_LIMIT_BYTES),
    )(pot, state_cf, m_b, ninv_b, w2e, bias_b)


# ----------------------------------------------------------------------------
# Glue: kernel construction (done once, at "reset"), c0/c1 routing, forward.
# ----------------------------------------------------------------------------
def _ring_kernel(D, rk, w, b):
    # ker_c(x, r, w, b) = sum_j b_j * exp(-((x - r_j)/w_j)^2 / 2)
    return jnp.sum(b * jnp.exp(-((D[..., None] - rk) / w) ** 2 / 2.0), axis=-1)


def build_kernels_fft(SX, SY, R, r, rk, w, b):
    x = jnp.arange(SX, dtype=jnp.float32)
    y = jnp.arange(SY, dtype=jnp.float32)
    X = x[:, None] - SX // 2
    Y = y[None, :] - SY // 2
    dist = jnp.sqrt(X ** 2 + Y ** 2)                              # (SX, SY)
    D = dist[None, :, :] / ((R + 15.0) * r)[:, None, None]        # (nb_k, SX, SY)
    ring = jnp.sum(
        b[:, None, None, :]
        * jnp.exp(-((D[..., None] - rk[:, None, None, :]) / w[:, None, None, :]) ** 2 / 2.0),
        axis=-1)
    kernels = jax.nn.sigmoid(-(D - 1.0) * 10.0) * ring
    kernels = kernels / jnp.sum(kernels, axis=(-2, -1), keepdims=True)
    # Pre-shift spatially so the post-irfft fftshift roll is not needed per step
    # (circular convolution is shift-equivariant -> identical output).
    kernels = jnp.roll(kernels, shift=(SX // 2, SY // 2), axis=(-2, -1))
    return jnp.fft.rfft2(kernels)                                 # (nb_k, SX, SY//2+1)


def build_wall_kernel_fft(SX, SY):
    x = jnp.arange(SX, dtype=jnp.float32)
    y = jnp.arange(SY, dtype=jnp.float32)
    X = x[:, None] - SX // 2
    Y = y[None, :] - SY // 2
    D = jnp.sqrt(X ** 2 + Y ** 2) / 4.0
    rk = jnp.array([0.0, 0.0, 0.0], jnp.float32)
    w = jnp.array([0.5, 0.1, 0.1], jnp.float32)
    b = jnp.array([1.0, 0.0, 0.0], jnp.float32)
    k = jax.nn.sigmoid(-(D - 1.0) * 10.0) * _ring_kernel(D, rk, w, b)
    k = k / jnp.sum(k)
    k = jnp.roll(k, shift=(SX // 2, SY // 2), axis=(-2, -1))      # pre-shift (see above)
    return jnp.fft.rfft2(k)                                       # (SX, SY//2+1)


def build_c0_c1(state_channels, hidden_channels, ss, sh, hh, hm):
    # Reproduces Lenia_Controller.reset() routing (valid for state_channels=1).
    C = state_channels + hidden_channels + 1
    hidden_idx = [i + state_channels for i in range(hidden_channels)]
    sensory_idx = list(range(state_channels))
    c0 = [0 for _ in range(sh * hidden_channels * state_channels)]
    c1 = []
    for i in hidden_idx:
        c1 += [i] * sh
    for i in hidden_idx:
        for j in hidden_idx:
            c0 += [i] * hh
            c1 += [j] * hh
    c1 += [C - 1] * (hidden_channels * hm)
    for i in hidden_idx:
        c0 += [i] * hm
    for i in sensory_idx:
        for j in sensory_idx:
            c0 += [i] * ss
            c1 += [j] * ss
    assert len(c0) == len(c1)
    return (jnp.array(c0, dtype=jnp.int32),
            jnp.array(c1, dtype=jnp.int32))


def make_controller(state_channels, hidden_channels, ss, sh, hh, hm, SX, SY):
    C = state_channels + hidden_channels + 1
    nb_k = (state_channels ** 2 * ss + state_channels * hidden_channels * sh
            + hidden_channels ** 2 * hh + hidden_channels * hm)
    c0, c1 = build_c0_c1(state_channels, hidden_channels, ss, sh, hh, hm)
    assert c0.shape[0] == nb_k
    nk1 = nb_k + 1

    n_cores, has_bf16_eup = _tpu_flavor()

    # Deterministic stand-in for LeniaUpdateRuleSpace.sample() (no checkpoint).
    key = jax.random.PRNGKey(0)
    ks = jax.random.split(key, 8)
    R = 8.0
    T = 10.0
    r = jax.random.uniform(ks[0], (nb_k,), minval=0.2, maxval=1.0)
    rk = jax.random.uniform(ks[1], (nb_k, 3), minval=0.0, maxval=1.0)
    b = jax.random.uniform(ks[2], (nb_k, 3), minval=0.001, maxval=1.0)
    w = jax.random.uniform(ks[3], (nb_k, 3), minval=0.01, maxval=0.5)
    h = jax.random.uniform(ks[4], (nb_k,), minval=0.0, maxval=1.0) / 3.0  # h/3 (reset())
    m = jax.random.uniform(ks[5], (nb_k,), minval=0.05, maxval=0.5)
    s = jax.random.uniform(ks[6], (nb_k,), minval=0.001, maxval=0.18)
    state0 = jax.random.uniform(ks[7], (1, SX, SY, C), minval=0.0, maxval=1.0,
                                dtype=jnp.float32)

    # W[c, k] = (h_k / T) if c1[k] == c else 0  — folds weighting + routing + 1/T.
    W = (jax.nn.one_hot(c1, C, dtype=jnp.float32).T * h[None, :]) / T     # (C, nb_k)
    W2 = 2.0 * W                                                          # folds *2
    bias = -jnp.sum(W, axis=1)                                            # folds -1
    # Wall column: applies to every channel except the wall itself; 1/T folded exactly once.
    wmask = (jnp.arange(C) < C - 1).astype(jnp.float32) / T               # (C,)
    W2e = jnp.concatenate([W2, wmask[:, None]], axis=1).astype(jnp.float32)  # (C, nk1)

    # --- Fourier-space constants (packed re/im, padded once) -----------------
    SF = SY // 2 + 1
    nf = SX * SF
    bpl_f = 2 * 4 * (2 * nk1 + 2 * C + 2 * nk1)        # streamed bytes / lane (dbl-buffered)
    tile_f, nf_pad = _pick_tile(nf, bpl_f, n_cores=n_cores)
    kernels_fft = build_kernels_fft(SX, SY, R, r, rk, w, b)               # (nb_k, SX, SF)
    wall_fft = build_wall_kernel_fft(SX, SY)                              # (SX, SF)
    kf_c = jnp.concatenate([kernels_fft, wall_fft[None]], axis=0)         # (nk1, SX, SF)
    kf = jnp.stack([jnp.real(kf_c), jnp.imag(kf_c)]).reshape(2, nk1, nf)
    kf = jnp.pad(kf.astype(jnp.float32), ((0, 0), (0, 0), (0, nf_pad - nf)))
    c0_ext = jnp.concatenate([c0, jnp.array([C - 1], jnp.int32)])
    g = jax.nn.one_hot(c0_ext, C, dtype=jnp.float32)                      # (nk1, C)

    # --- Spatial-space constants (lane-broadcast to the update tile width) ---
    n = SX * SY
    bpl_n = 2 * 4 * (3 * nk1 + 3 * C)
    tile_n, n_pad = _pick_tile(n, bpl_n, n_cores=n_cores)

    def bcast_rows(v, width):
        v = jnp.asarray(v, jnp.float32)
        return jnp.broadcast_to(v[:, None], (v.shape[0], width)) + 0.0

    m_ext = jnp.concatenate([m, jnp.zeros((1,), jnp.float32)])            # wall row unused
    ninv_ext = jnp.concatenate([-1.0 / (2.0 * s * s),
                                -jnp.ones((1,), jnp.float32)])            # wall row unused

    params = dict(
        kf=kf, g=g,
        m_b=bcast_rows(m_ext, tile_n),
        ninv_b=bcast_rows(ninv_ext, tile_n),
        w2e=W2e,
        bias_b=bcast_rows(bias, tile_n),
        # static tiling metadata (python ints/bools, consumed at trace time)
        tile_f=tile_f, nf=nf, nf_pad=nf_pad,
        tile_n=tile_n, n=n, n_pad=n_pad,
        use_bf16=has_bf16_eup,
    )
    return params, state0


def lenia_step_cf(world, params):
    """One Lenia step on a channel-first (C, SX, SY) f32 world. Multi-step
    callers should stay in this layout between steps (no per-step transposes)."""
    C, SX, SY = world.shape
    SF = SY // 2 + 1
    nf, nf_pad, tile_f = params['nf'], params['nf_pad'], params['tile_f']
    n, n_pad, tile_n = params['n'], params['n_pad'], params['tile_n']
    nk1 = params['kf'].shape[1]

    # TODO(synk): rfft2 / irfft2 have no Pallas TPU primitive; FFTs stay in XLA.
    world_fft = jnp.fft.rfft2(world)                                      # (C, SX, SF)
    wf = jnp.stack([jnp.real(world_fft), jnp.imag(world_fft)])
    wf = wf.reshape(2, C, nf).astype(jnp.float32)
    if nf_pad != nf:
        wf = jnp.pad(wf, ((0, 0), (0, 0), (0, nf_pad - nf)))

    # Pallas kernel 1: gather(c0) + complex multiply, packed (real, imag) in/out.
    prod = fourier_gather_mul(params['kf'], wf, params['g'], tile=tile_f)  # (2, nk1, nf_pad)

    pot_fft = jax.lax.complex(prod[0, :, :nf], prod[1, :, :nf]).reshape(nk1, SX, SF)
    pot = jnp.fft.irfft2(pot_fft, s=(SX, SY))                             # (nk1, SX, SY)
    # No per-step roll: kernels were pre-shifted at build time.
    pot = pot.reshape(nk1, n).astype(jnp.float32)

    state_cf = world.reshape(C, n)
    if n_pad != n:
        pot = jnp.pad(pot, ((0, 0), (0, n_pad - n)))
        state_cf = jnp.pad(state_cf, ((0, 0), (0, n_pad - n)))

    # Pallas kernel 2: growth + wall + channel accumulation + clamped Euler update.
    out_cf = lenia_update(pot, state_cf, params['m_b'], params['ninv_b'],
                          params['w2e'], params['bias_b'],
                          tile=tile_n, use_bf16=params['use_bf16'])
    return out_cf[:, :n].reshape(C, SX, SY)


def lenia_forward(state, params):
    """One Lenia_Controller.forward(): returns the next state (1, SX, SY, C)."""
    world = jnp.transpose(state[0], (2, 0, 1)).astype(jnp.float32)        # boundary only
    out = lenia_step_cf(world, params)
    return jnp.transpose(out, (1, 2, 0))[None]


if __name__ == "__main__":
    # Small, forward-consistent config: state_channels=1 (as the reset() routing
    # implies), hidden_channels=2, 2 kernels per connection, 32x32 world.
    state_channels = 1
    hidden_channels = 2
    ss_k, sh_k, hh_k, hm_k = 2, 2, 2, 2
    SX = SY = 32

    params, state0 = make_controller(state_channels, hidden_channels,
                                     ss_k, sh_k, hh_k, hm_k, SX, SY)

    step = jax.jit(functools.partial(lenia_forward, params=params))
    new_state = jax.block_until_ready(step(state0))

    assert new_state.shape == state0.shape
    assert new_state.dtype == jnp.float32
    assert bool(jnp.all(jnp.isfinite(new_state)))
    assert bool(jnp.all(new_state >= 0.0)) and bool(jnp.all(new_state <= 1.0))
    print("KERNEL_OK")
</pallas_src>

<mosaic_0001>
module attributes {stable_mosaic.version = 11 : i64} {
  func.func @_fourier_gather_mul_kernel(%arg0: i32, %arg1: memref<2x19x1024xf32, #tpu.memory_space<vmem>>, %arg2: memref<2x4x1024xf32, #tpu.memory_space<vmem>>, %arg3: memref<19x4xf32, #tpu.memory_space<vmem>>, %arg4: memref<2x19x1024xf32, #tpu.memory_space<vmem>>) attributes {dimension_semantics = [#tpu.dimension_semantics<parallel>], iteration_bounds = array<i64: 1>, scalar_prefetch = 0 : i64, scratch_operands = 0 : i64, tpu.core_type = #tpu.core_type<tc>, window_params = [{transform_indices = @transform_0, window_bounds = array<i64: 2, 19, 1024>}, {transform_indices = @transform_1, window_bounds = array<i64: 2, 4, 1024>}, {pipeline_mode = #tpu.pipeline_mode<synchronous>, transform_indices = @transform_2, window_bounds = array<i64: 19, 4>}, {transform_indices = @transform_3, window_bounds = array<i64: 2, 19, 1024>}]} {
    %c0 = arith.constant 0 : index
    %c0_0 = arith.constant 0 : index
    %c0_1 = arith.constant 0 : index
    %0 = vector.load %arg1[%c0, %c0_0, %c0_1] : memref<2x19x1024xf32, #tpu.memory_space<vmem>>, vector<1x19x1024xf32>
    %1 = vector.shape_cast %0 : vector<1x19x1024xf32> to vector<19x1024xf32>
    %c1 = arith.constant 1 : index
    %c0_2 = arith.constant 0 : index
    %c0_3 = arith.constant 0 : index
    %2 = vector.load %arg1[%c1, %c0_2, %c0_3] : memref<2x19x1024xf32, #tpu.memory_space<vmem>>, vector<1x19x1024xf32>
    %3 = vector.shape_cast %2 : vector<1x19x1024xf32> to vector<19x1024xf32>
    %c0_4 = arith.constant 0 : index
    %c0_5 = arith.constant 0 : index
    %c0_6 = arith.constant 0 : index
    %4 = vector.load %arg2[%c0_4, %c0_5, %c0_6] : memref<2x4x1024xf32, #tpu.memory_space<vmem>>, vector<1x4x1024xf32>
    %5 = vector.shape_cast %4 : vector<1x4x1024xf32> to vector<4x1024xf32>
    %c1_7 = arith.constant 1 : index
    %c0_8 = arith.constant 0 : index
    %c0_9 = arith.constant 0 : index
    %6 = vector.load %arg2[%c1_7, %c0_8, %c0_9] : memref<2x4x1024xf32, #tpu.memory_space<vmem>>, vector<1x4x1024xf32>
    %7 = vector.shape_cast %6 : vector<1x4x1024xf32> to vector<4x1024xf32>
    %c0_10 = arith.constant 0 : index
    %c0_11 = arith.constant 0 : index
    %8 = vector.load %arg3[%c0_10, %c0_11] : memref<19x4xf32, #tpu.memory_space<vmem>>, vector<19x4xf32>
    %cst = arith.constant dense<0.000000e+00> : vector<19x1024xf32>
    %9 = tpu.matmul %8, %5, %cst {dimension_numbers = #tpu.dot_dimension_numbers<[1], [0], [0], [1], [0, 0, 1, 1], [], []>} : vector<19x4xf32>, vector<4x1024xf32>, vector<19x1024xf32> -> vector<19x1024xf32>
    %cst_12 = arith.constant dense<0.000000e+00> : vector<19x1024xf32>
    %10 = tpu.matmul %8, %7, %cst_12 {dimension_numbers = #tpu.dot_dimension_numbers<[1], [0], [0], [1], [0, 0, 1, 1], [], []>} : vector<19x4xf32>, vector<4x1024xf32>, vector<19x1024xf32> -> vector<19x1024xf32>
    %11 = arith.mulf %1, %9 : vector<19x1024xf32>
    %12 = arith.mulf %3, %10 : vector<19x1024xf32>
    %13 = arith.subf %11, %12 : vector<19x1024xf32>
    %c0_13 = arith.constant 0 : index
    %c0_14 = arith.constant 0 : index
    %c0_15 = arith.constant 0 : index
    %14 = vector.load %arg4[%c0_13, %c0_14, %c0_15] : memref<2x19x1024xf32, #tpu.memory_space<vmem>>, vector<1x19x1024xf32>
    %15 = vector.shape_cast %14 : vector<1x19x1024xf32> to vector<19x1024xf32>
    %16 = vector.shape_cast %13 : vector<19x1024xf32> to vector<1x19x1024xf32>
    tpu.vector_store %arg4[%c0_13, %c0_14, %c0_15], %16 {strides = array<i32>} : memref<2x19x1024xf32, #tpu.memory_space<vmem>>, vector<1x19x1024xf32>,
    %17 = arith.mulf %1, %10 : vector<19x1024xf32>
    %18 = arith.mulf %3, %9 : vector<19x1024xf32>
    %19 = arith.addf %17, %18 : vector<19x1024xf32>
    %c1_16 = arith.constant 1 : index
    %c0_17 = arith.constant 0 : index
    %c0_18 = arith.constant 0 : index
    %20 = vector.load %arg4[%c1_16, %c0_17, %c0_18] : memref<2x19x1024xf32, #tpu.memory_space<vmem>>, vector<1x19x1024xf32>
    %21 = vector.shape_cast %20 : vector<1x19x1024xf32> to vector<19x1024xf32>
    %22 = vector.shape_cast %19 : vector<19x1024xf32> to vector<1x19x1024xf32>
    tpu.vector_store %arg4[%c1_16, %c0_17, %c0_18], %22 {strides = array<i32>} : memref<2x19x1024xf32, #tpu.memory_space<vmem>>, vector<1x19x1024xf32>,
    return
  }
  func.func @transform_0(%arg0: i32) -> (i32, i32, i32) {
    %c0_i32 = arith.constant 0 : i32
    %c0_i32_0 = arith.constant 0 : i32
    %c0_i32_1 = arith.constant 0 : i32
    return %c0_i32, %c0_i32_0, %arg0 : i32, i32, i32
  }
  func.func @transform_1(%arg0: i32) -> (i32, i32, i32) {
    %c0_i32 = arith.constant 0 : i32
    %c0_i32_0 = arith.constant 0 : i32
    %c0_i32_1 = arith.constant 0 : i32
    return %c0_i32, %c0_i32_0, %arg0 : i32, i32, i32
  }
  func.func @transform_2(%arg0: i32) -> (i32, i32) {
    %c0_i32 = arith.constant 0 : i32
    %c0_i32_0 = arith.constant 0 : i32
    %c0_i32_1 = arith.constant 0 : i32
    return %c0_i32, %c0_i32_0 : i32, i32
  }
  func.func @transform_3(%arg0: i32) -> (i32, i32, i32) {
    %c0_i32 = arith.constant 0 : i32
    %c0_i32_0 = arith.constant 0 : i32
    %c0_i32_1 = arith.constant 0 : i32
    return %c0_i32, %c0_i32_0, %arg0 : i32, i32, i32
  }
}

module attributes {stable_mosaic.version = 11 : i64} {
  func.func @_lenia_update_kernel(%arg0: i32, %arg1: memref<19x1024xf32, #tpu.memory_space<vmem>>, %arg2: memref<4x1024xf32, #tpu.memory_space<vmem>>, %arg3: memref<19x1024xf32, #tpu.memory_space<vmem>>, %arg4: memref<19x1024xf32, #tpu.memory_space<vmem>>, %arg5: memref<4x19xf32, #tpu.memory_space<vmem>>, %arg6: memref<4x1024xf32, #tpu.memory_space<vmem>>, %arg7: memref<4x1024xf32, #tpu.memory_space<vmem>>) attributes {dimension_semantics = [#tpu.dimension_semantics<parallel>], iteration_bounds = array<i64: 1>, scalar_prefetch = 0 : i64, scratch_operands = 0 : i64, tpu.core_type = #tpu.core_type<tc>, window_params = [{transform_indices = @transform_0, window_bounds = array<i64: 19, 1024>}, {transform_indices = @transform_1, window_bounds = array<i64: 4, 1024>}, {pipeline_mode = #tpu.pipeline_mode<synchronous>, transform_indices = @transform_2, window_bounds = array<i64: 19, 1024>}, {pipeline_mode = #tpu.pipeline_mode<synchronous>, transform_indices = @transform_3, window_bounds = array<i64: 19, 1024>}, {pipeline_mode = #tpu.pipeline_mode<synchronous>, transform_indices = @transform_4, window_bounds = array<i64: 4, 19>}, {pipeline_mode = #tpu.pipeline_mode<synchronous>, transform_indices = @transform_5, window_bounds = array<i64: 4, 1024>}, {transform_indices = @transform_6, window_bounds = array<i64: 4, 1024>}]} {
    %c0 = arith.constant 0 : index
    %c0_0 = arith.constant 0 : index
    %0 = vector.load %arg1[%c0, %c0_0] : memref<19x1024xf32, #tpu.memory_space<vmem>>, vector<19x1024xf32>
    %c0_1 = arith.constant 0 : index
    %c0_2 = arith.constant 0 : index
    %1 = vector.load %arg3[%c0_1, %c0_2] : memref<19x1024xf32, #tpu.memory_space<vmem>>, vector<19x1024xf32>
    %2 = arith.subf %0, %1 : vector<19x1024xf32>
    %3 = arith.mulf %2, %2 : vector<19x1024xf32>
    %c0_3 = arith.constant 0 : index
    %c0_4 = arith.constant 0 : index
    %4 = vector.load %arg4[%c0_3, %c0_4] : memref<19x1024xf32, #tpu.memory_space<vmem>>, vector<19x1024xf32>
    %5 = arith.mulf %3, %4 : vector<19x1024xf32>
    %6 = math.exp %5 : vector<19x1024xf32>
    %cst = arith.constant 9.99999993E-9 : f32
    %7 = vector.broadcast %cst : f32 to vector<19x1024xf32>
    %8 = arith.subf %0, %7 : vector<19x1024xf32>
    %cst_5 = arith.constant 0.000000e+00 : f32
    %cst_6 = arith.constant 1.000000e+00 : f32
    %9 = vector.broadcast %cst_5 : f32 to vector<19x1024xf32>
    %10 = arith.maximumf %9, %8 : vector<19x1024xf32>
    %11 = vector.broadcast %cst_6 : f32 to vector<19x1024xf32>
    %12 = arith.minimumf %11, %10 : vector<19x1024xf32>
    %cst_7 = arith.constant 0.000000e+00 : f32
    %13 = vector.broadcast %cst_7 : f32 to vector<19x1024xf32>
    %14 = arith.subf %13, %12 : vector<19x1024xf32>
    %cst_8 = arith.constant 1.000000e+01 : f32
    %15 = vector.broadcast %cst_8 : f32 to vector<19x1024xf32>
    %16 = arith.mulf %14, %15 : vector<19x1024xf32>
    %17 = tpu.iota {dimensions = array<i32: 0>} : vector<19x1024xi32>
    %c18_i32 = arith.constant 18 : i32
    %18 = vector.broadcast %c18_i32 : i32 to vector<19x1024xi32>
    %19 = arith.cmpi slt, %17, %18 : vector<19x1024xi32>
    %20 = arith.select %19, %6, %16 : vector<19x1024xi1>, vector<19x1024xf32>
    %c0_9 = arith.constant 0 : index
    %c0_10 = arith.constant 0 : index
    %21 = vector.load %arg5[%c0_9, %c0_10] : memref<4x19xf32, #tpu.memory_space<vmem>>, vector<4x19xf32>
    %cst_11 = arith.constant dense<0.000000e+00> : vector<4x1024xf32>
    %22 = tpu.matmul %21, %20, %cst_11 {dimension_numbers = #tpu.dot_dimension_numbers<[1], [0], [0], [1], [0, 0, 1, 1], [], []>} : vector<4x19xf32>, vector<19x1024xf32>, vector<4x1024xf32> -> vector<4x1024xf32>
    %c0_12 = arith.constant 0 : index
    %c0_13 = arith.constant 0 : index
    %23 = vector.load %arg2[%c0_12, %c0_13] : memref<4x1024xf32, #tpu.memory_space<vmem>>, vector<4x1024xf32>
    %24 = arith.addf %23, %22 : vector<4x1024xf32>
    %c0_14 = arith.constant 0 : index
    %c0_15 = arith.constant 0 : index
    %25 = vector.load %arg6[%c0_14, %c0_15] : memref<4x1024xf32, #tpu.memory_space<vmem>>, vector<4x1024xf32>
    %26 = arith.addf %24, %25 : vector<4x1024xf32>
    %cst_16 = arith.constant 0.000000e+00 : f32
    %cst_17 = arith.constant 1.000000e+00 : f32
    %27 = vector.broadcast %cst_16 : f32 to vector<4x1024xf32>
    %28 = arith.maximumf %27, %26 : vector<4x1024xf32>
    %29 = vector.broadcast %cst_17 : f32 to vector<4x1024xf32>
    %30 = arith.minimumf %29, %28 : vector<4x1024xf32>
    %c0_18 = arith.constant 0 : index
    %c0_19 = arith.constant 0 : index
    %31 = vector.load %arg7[%c0_18, %c0_19] : memref<4x1024xf32, #tpu.memory_space<vmem>>, vector<4x1024xf32>
    tpu.vector_store %arg7[%c0_18, %c0_19], %30 {strides = array<i32>} : memref<4x1024xf32, #tpu.memory_space<vmem>>, vector<4x1024xf32>,
    return
  }
  func.func @transform_0(%arg0: i32) -> (i32, i32) {
    %c0_i32 = arith.constant 0 : i32
    %c0_i32_0 = arith.constant 0 : i32
    return %c0_i32, %arg0 : i32, i32
  }
  func.func @transform_1(%arg0: i32) -> (i32, i32) {
    %c0_i32 = arith.constant 0 : i32
    %c0_i32_0 = arith.constant 0 : i32
    return %c0_i32, %arg0 : i32, i32
  }
  func.func @transform_2(%arg0: i32) -> (i32, i32) {
    %c0_i32 = arith.constant 0 : i32
    %c0_i32_0 = arith.constant 0 : i32
    %c0_i32_1 = arith.constant 0 : i32
    return %c0_i32, %c0_i32_0 : i32, i32
  }
  func.func @transform_3(%arg0: i32) -> (i32, i32) {
    %c0_i32 = arith.constant 0 : i32
    %c0_i32_0 = arith.constant 0 : i32
    %c0_i32_1 = arith.constant 0 : i32
    return %c0_i32, %c0_i32_0 : i32, i32
  }
  func.func @transform_4(%arg0: i32) -> (i32, i32) {
    %c0_i32 = arith.constant 0 : i32
    %c0_i32_0 = arith.constant 0 : i32
    %c0_i32_1 = arith.constant 0 : i32
    return %c0_i32, %c0_i32_0 : i32, i32
  }
  func.func @transform_5(%arg0: i32) -> (i32, i32) {
    %c0_i32 = arith.constant 0 : i32
    %c0_i32_0 = arith.constant 0 : i32
    %c0_i32_1 = arith.constant 0 : i32
    return %c0_i32, %c0_i32_0 : i32, i32
  }
  func.func @transform_6(%arg0: i32) -> (i32, i32) {
    %c0_i32 = arith.constant 0 : i32
    %c0_i32_0 = arith.constant 0 : i32
    return %c0_i32, %arg0 : i32, i32
  }
}

</mosaic_0001>

<llo_original>
// kernel: lenia_forward.2
$region0: #{lenia_forward.2}
  #allocation0 [shape = 'u32[]', space=smem, size = 0x4, offset = 0x4, fixed_abs, tag = 'smem constant byte address 0x4 - core index']
  #allocation1 [shape = 'u32[144,128]{1,0:T(1,128)}', space=vmem, size = 0x12000, scoped, tag = 'internal scratch']
  %s0 = inlined_call_operand.vmem [shape: f32[2,19,1024], index: 0, kind: input, shape index: {}]
  %s1 = inlined_call_operand.vmem [shape: f32[2,4,1024], index: 1, kind: input, shape index: {}]
  %s2 = inlined_call_operand.vmem [shape: f32[19,4], index: 2, kind: input, shape index: {}]
  %s3 = inlined_call_operand.vmem [shape: f32[2,19,1024], index: 3, kind: output, shape index: {}]
  %s4 = sld [smem:[#allocation0]]
  $region22: #{lenia_forward.2} parent=0
    _
  %s6 = ssub.s32 1, %s4
  %s7 = scalar_select 0, %s6, %s4
  // Predicated region
  $region2: #{lenia_forward.2} parent=0 // pred_check
    _
  $region3: #{lenia_forward.2} parent=0 // pred_check_branch
    %9 = sbr.rel (0) target = $region5
  $region4: #{lenia_forward.2} parent=0 // pred_region
    _
  $region5: #{lenia_forward.2} parent=0 // pred_fallthru
    _
  // Predicated region
  $region6: #{lenia_forward.2} parent=0 // pred_check
    _
  $region7: #{lenia_forward.2} parent=0 // pred_check_branch
    %11 = sbr.rel (0) target = $region9
  $region8: #{lenia_forward.2} parent=0 // pred_region
    _
  $region9: #{lenia_forward.2} parent=0 // pred_fallthru
    _
  // Predicated region
  $region10: #{lenia_forward.2} parent=0 // pred_check
    _
  $region11: #{lenia_forward.2} parent=0 // pred_check_branch
    %13 = sbr.rel (0) target = $region13
  $region12: #{lenia_forward.2} parent=0 // pred_region
    _
  $region13: #{lenia_forward.2} parent=0 // pred_fallthru
    _
  %v14 = vld [vmem:[%s0] sm:$0xff]
  %v15 = vld [vmem:[%s0 + $0x8] sm:$0xff]
  %v16 = vld [vmem:[%s0 + $0x10] sm:$0xff]
  %v17 = vld [vmem:[%s0 + $0x18] sm:$0xff]
  %v18 = vld [vmem:[%s0 + $0x20] sm:$0xff]
  %v19 = vld [vmem:[%s0 + $0x28] sm:$0xff]
  %v20 = vld [vmem:[%s0 + $0x30] sm:$0xff]
  %v21 = vld [vmem:[%s0 + $0x38] sm:$0xff]
  %v22 = vld [vmem:[%s0 + $0x40] sm:$0xff]
  %v23 = vld [vmem:[%s0 + $0x48] sm:$0xff]
  %v24 = vld [vmem:[%s0 + $0x50] sm:$0xff]
  %v25 = vld [vmem:[%s0 + $0x58] sm:$0xff]
  %v26 = vld [vmem:[%s0 + $0x60] sm:$0xff]
  %v27 = vld [vmem:[%s0 + $0x68] sm:$0xff]
  %v28 = vld [vmem:[%s0 + $0x70] sm:$0xff]
  %v29 = vld [vmem:[%s0 + $0x78] sm:$0xff]
  %v30 = vld [vmem:[%s0 + $0x80] sm:$0x7]
  %v31 = vld [vmem:[%s0 + $0x88] sm:$0x7]
  %v32 = vld [vmem:[%s0 + $0x90] sm:$0x7]
  %v33 = vld [vmem:[%s0 + $0x98] sm:$0x7]
  %v34 = vld [vmem:[%s0 + $0xa0] sm:$0x7]
  %v35 = vld [vmem:[%s0 + $0xa8] sm:$0x7]
  %v36 = vld [vmem:[%s0 + $0xb0] sm:$0x7]
  %v37 = vld [vmem:[%s0 + $0xb8] sm:$0x7]
  %s38 = scalar_lea.vmem %s0, 192
  %v39 = vld [vmem:[%s38] sm:$0xff]
  %v40 = vld [vmem:[%s38 + $0x8] sm:$0xff]
  %v41 = vld [vmem:[%s38 + $0x10] sm:$0xff]
  %v42 = vld [vmem:[%s38 + $0x18] sm:$0xff]
  %v43 = vld [vmem:[%s38 + $0x20] sm:$0xff]
  %v44 = vld [vmem:[%s38 + $0x28] sm:$0xff]
  %v45 = vld [vmem:[%s38 + $0x30] sm:$0xff]
  %v46 = vld [vmem:[%s38 + $0x38] sm:$0xff]
  %v47 = vld [vmem:[%s38 + $0x40] sm:$0xff]
  %v48 = vld [vmem:[%s38 + $0x48] sm:$0xff]
  %v49 = vld [vmem:[%s38 + $0x50] sm:$0xff]
  %v50 = vld [vmem:[%s38 + $0x58] sm:$0xff]
  %v51 = vld [vmem:[%s38 + $0x60] sm:$0xff]
  %v52 = vld [vmem:[%s38 + $0x68] sm:$0xff]
  %v53 = vld [vmem:[%s38 + $0x70] sm:$0xff]
  %v54 = vld [vmem:[%s38 + $0x78] sm:$0xff]
  %v55 = vld [vmem:[%s38 + $0x80] sm:$0x7]
  %v56 = vld [vmem:[%s38 + $0x88] sm:$0x7]
  %v57 = vld [vmem:[%s38 + $0x90] sm:$0x7]
  %v58 = vld [vmem:[%s38 + $0x98] sm:$0x7]
  %v59 = vld [vmem:[%s38 + $0xa0] sm:$0x7]
  %v60 = vld [vmem:[%s38 + $0xa8] sm:$0x7]
  %v61 = vld [vmem:[%s38 + $0xb0] sm:$0x7]
  %v62 = vld [vmem:[%s38 + $0xb8] sm:$0x7]
  %v63 = vld [vmem:[%s1] sm:$0xff]
  %v64 = vld [vmem:[%s1 + $0x8] sm:$0xff]
  %v65 = vld [vmem:[%s1 + $0x10] sm:$0xff]
  %v66 = vld [vmem:[%s1 + $0x18] sm:$0xff]
  %s67 = scalar_lea.vmem %s1, 32
  %v68 = vld [vmem:[%s67] sm:$0xff]
  %v69 = vld [vmem:[%s67 + $0x8] sm:$0xff]
  %v70 = vld [vmem:[%s67 + $0x10] sm:$0xff]
  %v71 = vld [vmem:[%s67 + $0x18] sm:$0xff]
  %v72 = vld [vmem:[%s2] sm:$0xff]
  %v73 = vld [vmem:[%s2 + $0x8] sm:$0xff]
  %v74 = vld [vmem:[%s2 + $0x10] sm:$0x7]
  %v79 = vcombine.high %v63, %v63
  %v80 = vcombine.high %v64, %v64
  %v81 = vcombine.high %v65, %v65
  %v82 = vcombine.high %v66, %v66
  %vm83 = vcmask 31744
  %v85 = vsel %vm83, %v72, 0
  %v88 = vsel %vm83, %v73, 0
  %v91 = vsel %vm83, %v74, 0
  %vm93 = vcmask 1043456
  %v94 = vsel %vm93, %v63, 0
  %v96 = vsel %vm93, %v79, 0
  %v98 = vsel %vm93, %v64, 0
  %v100 = vsel %vm93, %v80, 0
  %v102 = vsel %vm93, %v65, 0
  %v104 = vsel %vm93, %v81, 0
  %v106 = vsel %vm93, %v66, 0
  %v108 = vsel %vm93, %v82, 0
  %110 = vmatprep.subr.mxu0 0.0
  %111 = vmatpush1.msra.mxu0 0.0
  %112 = vmatprep.subr.mxu0 0.0
  %113 = vmatpush1.msra.mxu0 0.0
  %114 = vmatprep.subr.mxu0 0.0
  %115 = vmatpush1.msra.mxu0 0.0
  %116 = vmatprep.subr.mxu0 0.0
  %117 = vmatpush1.msra.mxu0 0.0
  %118 = vmatprep.subr.mxu0 0.0
  %119 = vmatpush1.msra.mxu0 0.0
  %120 = vmatprep.subr.mxu0 0.0
  %121 = vmatpush1.msra.mxu0 0.0
  %122 = vmatprep.subr.mxu0 0.0
  %123 = vmatpush1.msra.mxu0 0.0
  %124 = vmatprep.subr.mxu0 0.0
  %125 = vmatpush1.msra.mxu0 0.0
  %126 = vmatprep.subr.mxu0 0.0
  %127 = vmatpush1.msra.mxu0 0.0
  %128 = vmatprep.subr.mxu0 0.0
  %129 = vmatpush1.msra.mxu0 0.0
  %130 = vmatprep.subr.mxu0 0.0
  %131 = vmatpush1.msra.mxu0 0.0
  %132 = vmatprep.subr.mxu0 0.0
  %133 = vmatpush1.msra.mxu0 0.0
  %134 = vmatprep.subr.mxu0 0.0
  %135 = vmatpush1.msra.mxu0 0.0
  %136 = vmatprep.subr.mxu0 0.0
  %137 = vmatpush1.msra.mxu0 0.0
  %138 = vmatprep.subr.mxu0 0.0
  %139 = vmatpush1.msra.mxu0 0.0
  %140 = vmatprep.subr.mxu0 %v96
  %141 = vmatpush1.msra.mxu0 %v94
  %142 = vmatprep.subr.mxu0 0.0
  %143 = vmatpush2.msra.mxu0 0.0
  %144 = vmatprep.subr.mxu0 0.0
  %145 = vmatpush2.msra.mxu0 0.0
  %146 = vmatprep.subr.mxu0 0.0
  %147 = vmatpush2.msra.mxu0 0.0
  %148 = vmatprep.subr.mxu0 0.0
  %149 = vmatpush2.msra.mxu0 0.0
  %150 = vmatprep.subr.mxu0 0.0
  %151 = vmatpush2.msra.mxu0 0.0
  %152 = vmatprep.subr.mxu0 0.0
  %153 = vmatpush2.msra.mxu0 0.0
  %154 = vmatprep.subr.mxu0 0.0
  %155 = vmatpush2.msra.mxu0 0.0
  %156 = vmatprep.subr.mxu0 0.0
  %157 = vmatpush2.msra.mxu0 0.0
  %158 = vmatprep.subr.mxu0 0.0
  %159 = vmatpush2.msra.mxu0 0.0
  %160 = vmatprep.subr.mxu0 0.0
  %161 = vmatpush2.msra.mxu0 0.0
  %162 = vmatprep.subr.mxu0 0.0
  %163 = vmatpush2.msra.mxu0 0.0
  %164 = vmatprep.subr.mxu0 0.0
  %165 = vmatpush2.msra.mxu0 0.0
  %166 = vmatprep.subr.mxu0 0.0
  %167 = vmatpush2.msra.mxu0 0.0
  %168 = vmatprep.subr.mxu0 0.0
  %169 = vmatpush2.msra.mxu0 0.0
  %170 = vmatprep.subr.mxu0 0.0
  %171 = vmatpush2.msra.mxu0 0.0
  %172 = vmatprep.subr.mxu0 0.0
  %173 = vmatpush2.msra.mxu0 0.0
  %174 = vmatprep.mubr.f32.mxu0 0.0
  %175 = vmatmul.mubr.f32.gmra.mxu0 %v85
  %v176 = vpop.f32.mrf.mxu0
  %v177 = vadd.f32 0.0, %v176
  %v178 = vpop.f32.mrf.mxu0
  %v179 = vadd.f32 0.0, %v178
  %180 = vmatprep.mubr.f32.mxu0 0.0
  %181 = vmatmul.mubr.f32.gmra.mxu0 %v88
  %v182 = vpop.f32.mrf.mxu0
  %v183 = vadd.f32 0.0, %v182
  %v184 = vpop.f32.mrf.mxu0
  %v185 = vadd.f32 0.0, %v184
  %186 = vmatprep.mubr.f32.mxu0 0.0
  %187 = vmatmul.mubr.f32.gmra.mxu0 %v91
  %v188 = vpop.f32.mrf.mxu0
  %v189 = vadd.f32 0.0, %v188
  %v190 = vpop.f32.mrf.mxu0
  %v191 = vadd.f32 0.0, %v190
  %192 = vdwg.mxu0
  %193 = vmatprep.subr.mxu0 0.0
  %194 = vmatpush1.msra.mxu0 0.0
  %195 = vmatprep.subr.mxu0 0.0
  %196 = vmatpush1.msra.mxu0 0.0
  %197 = vmatprep.subr.mxu0 0.0
  %198 = vmatpush1.msra.mxu0 0.0
  %199 = vmatprep.subr.mxu0 0.0
  %200 = vmatpush1.msra.mxu0 0.0
  %201 = vmatprep.subr.mxu0 0.0
  %202 = vmatpush1.msra.mxu0 0.0
  %203 = vmatprep.subr.mxu0 0.0
  %204 = vmatpush1.msra.mxu0 0.0
  %205 = vmatprep.subr.mxu0 0.0
  %206 = vmatpush1.msra.mxu0 0.0
  %207 = vmatprep.subr.mxu0 0.0
  %208 = vmatpush1.msra.mxu0 0.0
  %209 = vmatprep.subr.mxu0 0.0
  %210 = vmatpush1.msra.mxu0 0.0
  %211 = vmatprep.subr.mxu0 0.0
  %212 = vmatpush1.msra.mxu0 0.0
  %213 = vmatprep.subr.mxu0 0.0
  %214 = vmatpush1.msra.mxu0 0.0
  %215 = vmatprep.subr.mxu0 0.0
  %216 = vmatpush1.msra.mxu0 0.0
  %217 = vmatprep.subr.mxu0 0.0
  %218 = vmatpush1.msra.mxu0 0.0
  %219 = vmatprep.subr.mxu0 0.0
  %220 = vmatpush1.msra.mxu0 0.0
  %221 = vmatprep.subr.mxu0 0.0
  %222 = vmatpush1.msra.mxu0 0.0
  %223 = vmatprep.subr.mxu0 %v100
  %224 = vmatpush1.msra.mxu0 %v98
  %225 = vmatprep.subr.mxu0 0.0
  %226 = vmatpush2.msra.mxu0 0.0
  %227 = vmatprep.subr.mxu0 0.0
  %228 = vmatpush2.msra.mxu0 0.0
  %229 = vmatprep.subr.mxu0 0.0
  %230 = vmatpush2.msra.mxu0 0.0
  %231 = vmatprep.subr.mxu0 0.0
  %232 = vmatpush2.msra.mxu0 0.0
  %233 = vmatprep.subr.mxu0 0.0
  %234 = vmatpush2.msra.mxu0 0.0
  %235 = vmatprep.subr.mxu0 0.0
  %236 = vmatpush2.msra.mxu0 0.0
  %237 = vmatprep.subr.mxu0 0.0
  %238 = vmatpush2.msra.mxu0 0.0
  %239 = vmatprep.subr.mxu0 0.0
  %240 = vmatpush2.msra.mxu0 0.0
  %241 = vmatprep.subr.mxu0 0.0
  %242 = vmatpush2.msra.mxu0 0.0
  %243 = vmatprep.subr.mxu0 0.0
  %244 = vmatpush2.msra.mxu0 0.0
  %245 = vmatprep.subr.mxu0 0.0
  %246 = vmatpush2.msra.mxu0 0.0
  %247 = vmatprep.subr.mxu0 0.0
  %248 = vmatpush2.msra.mxu0 0.0
  %249 = vmatprep.subr.mxu0 0.0
  %250 = vmatpush2.msra.mxu0 0.0
  %251 = vmatprep.subr.mxu0 0.0
  %252 = vmatpush2.msra.mxu0 0.0
  %253 = vmatprep.subr.mxu0 0.0
  %254 = vmatpush2.msra.mxu0 0.0
  %255 = vmatprep.subr.mxu0 0.0
  %256 = vmatpush2.msra.mxu0 0.0
  %257 = vmatprep.mubr.f32.mxu0 0.0
  %258 = vmatmul.mubr.f32.gmra.mxu0 %v85
  %v259 = vpop.f32.mrf.mxu0
  %v260 = vadd.f32 0.0, %v259
  %v261 = vpop.f32.mrf.mxu0
  %v262 = vadd.f32 0.0, %v261
  %263 = vmatprep.mubr.f32.mxu0 0.0
  %264 = vmatmul.mubr.f32.gmra.mxu0 %v88
  %v265 = vpop.f32.mrf.mxu0
  %v266 = vadd.f32 0.0, %v265
  %v267 = vpop.f32.mrf.mxu0
  %v268 = vadd.f32 0.0, %v267
  %269 = vmatprep.mubr.f32.mxu0 0.0
  %270 = vmatmul.mubr.f32.gmra.mxu0 %v91
  %v271 = vpop.f32.mrf.mxu0
  %v272 = vadd.f32 0.0, %v271
  %v273 = vpop.f32.mrf.mxu0
  %v274 = vadd.f32 0.0, %v273
  %275 = vdwg.mxu0
  %276 = vmatprep.subr.mxu0 0.0
  %277 = vmatpush1.msra.mxu0 0.0
  %278 = vmatprep.subr.mxu0 0.0
  %279 = vmatpush1.msra.mxu0 0.0
  %280 = vmatprep.subr.mxu0 0.0
  %281 = vmatpush1.msra.mxu0 0.0
  %282 = vmatprep.subr.mxu0 0.0
  %283 = vmatpush1.msra.mxu0 0.0
  %284 = vmatprep.subr.mxu0 0.0
  %285 = vmatpush1.msra.mxu0 0.0
  %286 = vmatprep.subr.mxu0 0.0
  %287 = vmatpush1.msra.mxu0 0.0
  %288 = vmatprep.subr.mxu0 0.0
  %289 = vmatpush1.msra.mxu0 0.0
  %290 = vmatprep.subr.mxu0 0.0
  %291 = vmatpush1.msra.mxu0 0.0
  %292 = vmatprep.subr.mxu0 0.0
  %293 = vmatpush1.msra.mxu0 0.0
  %294 = vmatprep.subr.mxu0 0.0
  %295 = vmatpush1.msra.mxu0 0.0
  %296 = vmatprep.subr.mxu0 0.0
  %297 = vmatpush1.msra.mxu0 0.0
  %298 = vmatprep.subr.mxu0 0.0
  %299 = vmatpush1.msra.mxu0 0.0
  %300 = vmatprep.subr.mxu0 0.0
  %301 = vmatpush1.msra.mxu0 0.0
  %302 = vmatprep.subr.mxu0 0.0
  %303 = vmatpush1.msra.mxu0 0.0
  %304 = vmatprep.subr.mxu0 0.0
  %305 = vmatpush1.msra.mxu0 0.0
  %306 = vmatprep.subr.mxu0 %v104
  %307 = vmatpush1.msra.mxu0 %v102
  %308 = vmatprep.subr.mxu0 0.0
  %309 = vmatpush2.msra.mxu0 0.0
  %310 = vmatprep.subr.mxu0 0.0
  %311 = vmatpush2.msra.mxu0 0.0
  %312 = vmatprep.subr.mxu0 0.0
  %313 = vmatpush2.msra.mxu0 0.0
  %314 = vmatprep.subr.mxu0 0.0
  %315 = vmatpush2.msra.mxu0 0.0
  %316 = vmatprep.subr.mxu0 0.0
  %317 = vmatpush2.msra.mxu0 0.0
  %318 = vmatprep.subr.mxu0 0.0
  %319 = vmatpush2.msra.mxu0 0.0
  %320 = vmatprep.subr.mxu0 0.0
  %321 = vmatpush2.msra.mxu0 0.0
  %322 = vmatprep.subr.mxu0 0.0
  %323 = vmatpush2.msra.mxu0 0.0
  %324 = vmatprep.subr.mxu0 0.0
  %325 = vmatpush2.msra.mxu0 0.0
  %326 = vmatprep.subr.mxu0 0.0
  %327 = vmatpush2.msra.mxu0 0.0
  %328 = vmatprep.subr.mxu0 0.0
  %329 = vmatpush2.msra.mxu0 0.0
  %330 = vmatprep.subr.mxu0 0.0
  %331 = vmatpush2.msra.mxu0 0.0
  %332 = vmatprep.subr.mxu0 0.0
  %333 = vmatpush2.msra.mxu0 0.0
  %334 = vmatprep.subr.mxu0 0.0
  %335 = vmatpush2.msra.mxu0 0.0
  %336 = vmatprep.subr.mxu0 0.0
  %337 = vmatpush2.msra.mxu0 0.0
  %338 = vmatprep.subr.mxu0 0.0
  %339 = vmatpush2.msra.mxu0 0.0
  %340 = vmatprep.mubr.f32.mxu0 0.0
  %341 = vmatmul.mubr.f32.gmra.mxu0 %v85
  %v342 = vpop.f32.mrf.mxu0
  %v343 = vadd.f32 0.0, %v342
  %v344 = vpop.f32.mrf.mxu0
  %v345 = vadd.f32 0.0, %v344
  %346 = vmatprep.mubr.f32.mxu0 0.0
  %347 = vmatmul.mubr.f32.gmra.mxu0 %v88
  %v348 = vpop.f32.mrf.mxu0
  %v349 = vadd.f32 0.0, %v348
  %v350 = vpop.f32.mrf.mxu0
  %v351 = vadd.f32 0.0, %v350
  %352 = vmatprep.mubr.f32.mxu0 0.0
  %353 = vmatmul.mubr.f32.gmra.mxu0 %v91
  %v354 = vpop.f32.mrf.mxu0
  %v355 = vadd.f32 0.0, %v354
  %v356 = vpop.f32.mrf.mxu0
  %v357 = vadd.f32 0.0, %v356
  %358 = vdwg.mxu0
  %359 = vmatprep.subr.mxu0 0.0
  %360 = vmatpush1.msra.mxu0 0.0
  %361 = vmatprep.subr.mxu0 0.0
  %362 = vmatpush1.msra.mxu0 0.0
  %363 = vmatprep.subr.mxu0 0.0
  %364 = vmatpush1.msra.mxu0 0.0
  %365 = vmatprep.subr.mxu0 0.0
  %366 = vmatpush1.msra.mxu0 0.0
  %367 = vmatprep.subr.mxu0 0.0
  %368 = vmatpush1.msra.mxu0 0.0
  %369 = vmatprep.subr.mxu0 0.0
  %370 = vmatpush1.msra.mxu0 0.0
  %371 = vmatprep.subr.mxu0 0.0
  %372 = vmatpush1.msra.mxu0 0.0
  %373 = vmatprep.subr.mxu0 0.0
  %374 = vmatpush1.msra.mxu0 0.0
  %375 = vmatprep.subr.mxu0 0.0
  %376 = vmatpush1.msra.mxu0 0.0
  %377 = vmatprep.subr.mxu0 0.0
  %378 = vmatpush1.msra.mxu0 0.0
  %379 = vmatprep.subr.mxu0 0.0
  %380 = vmatpush1.msra.mxu0 0.0
  %381 = vmatprep.subr.mxu0 0.0
  %382 = vmatpush1.msra.mxu0 0.0
  %383 = vmatprep.subr.mxu0 0.0
  %384 = vmatpush1.msra.mxu0 0.0
  %385 = vmatprep.subr.mxu0 0.0
  %386 = vmatpush1.msra.mxu0 0.0
  %387 = vmatprep.subr.mxu0 0.0
  %388 = vmatpush1.msra.mxu0 0.0
  %389 = vmatprep.subr.mxu0 %v108
  %390 = vmatpush1.msra.mxu0 %v106
  %391 = vmatprep.subr.mxu0 0.0
  %392 = vmatpush2.msra.mxu0 0.0
  %393 = vmatprep.subr.mxu0 0.0
  %394 = vmatpush2.msra.mxu0 0.0
  %395 = vmatprep.subr.mxu0 0.0
  %396 = vmatpush2.msra.mxu0 0.0
  %397 = vmatprep.subr.mxu0 0.0
  %398 = vmatpush2.msra.mxu0 0.0
  %399 = vmatprep.subr.mxu0 0.0
  %400 = vmatpush2.msra.mxu0 0.0
  %401 = vmatprep.subr.mxu0 0.0
  %402 = vmatpush2.msra.mxu0 0.0
  %403 = vmatprep.subr.mxu0 0.0
  %404 = vmatpush2.msra.mxu0 0.0
  %405 = vmatprep.subr.mxu0 0.0
  %406 = vmatpush2.msra.mxu0 0.0
  %407 = vmatprep.subr.mxu0 0.0
  %408 = vmatpush2.msra.mxu0 0.0
  %409 = vmatprep.subr.mxu0 0.0
  %410 = vmatpush2.msra.mxu0 0.0
  %411 = vmatprep.subr.mxu0 0.0
  %412 = vmatpush2.msra.mxu0 0.0
  %413 = vmatprep.subr.mxu0 0.0
  %414 = vmatpush2.msra.mxu0 0.0
  %415 = vmatprep.subr.mxu0 0.0
  %416 = vmatpush2.msra.mxu0 0.0
  %417 = vmatprep.subr.mxu0 0.0
  %418 = vmatpush2.msra.mxu0 0.0
  %419 = vmatprep.subr.mxu0 0.0
  %420 = vmatpush2.msra.mxu0 0.0
  %421 = vmatprep.subr.mxu0 0.0
  %422 = vmatpush2.msra.mxu0 0.0
  %423 = vmatprep.mubr.f32.mxu0 0.0
  %424 = vmatmul.mubr.f32.gmra.mxu0 %v85
  %v425 = vpop.f32.mrf.mxu0
  %v426 = vadd.f32 0.0, %v425
  %v427 = vpop.f32.mrf.mxu0
  %v428 = vadd.f32 0.0, %v427
  %429 = vmatprep.mubr.f32.mxu0 0.0
  %430 = vmatmul.mubr.f32.gmra.mxu0 %v88
  %v431 = vpop.f32.mrf.mxu0
  %v432 = vadd.f32 0.0, %v431
  %v433 = vpop.f32.mrf.mxu0
  %v434 = vadd.f32 0.0, %v433
  %435 = vmatprep.mubr.f32.mxu0 0.0
  %436 = vmatmul.mubr.f32.gmra.mxu0 %v91
  %v437 = vpop.f32.mrf.mxu0
  %v438 = vadd.f32 0.0, %v437
  %v439 = vpop.f32.mrf.mxu0
  %v440 = vadd.f32 0.0, %v439
  %441 = vdwg.mxu0
  %v446 = vcombine.high %v68, %v68
  %v447 = vcombine.high %v69, %v69
  %v448 = vcombine.high %v70, %v70
  %v449 = vcombine.high %v71, %v71
  %v450 = vsel %vm93, %v68, 0
  %v452 = vsel %vm93, %v446, 0
  %v454 = vsel %vm93, %v69, 0
  %v456 = vsel %vm93, %v447, 0
  %v458 = vsel %vm93, %v70, 0
  %v460 = vsel %vm93, %v448, 0
  %v462 = vsel %vm93, %v71, 0
  %v464 = vsel %vm93, %v449, 0
  %466 = vmatprep.subr.mxu0 0.0
  %467 = vmatpush1.msra.mxu0 0.0
  %468 = vmatprep.subr.mxu0 0.0
  %469 = vmatpush1.msra.mxu0 0.0
  %470 = vmatprep.subr.mxu0 0.0
  %471 = vmatpush1.msra.mxu0 0.0
  %472 = vmatprep.subr.mxu0 0.0
  %473 = vmatpush1.msra.mxu0 0.0
  %474 = vmatprep.subr.mxu0 0.0
  %475 = vmatpush1.msra.mxu0 0.0
  %476 = vmatprep.subr.mxu0 0.0
  %477 = vmatpush1.msra.mxu0 0.0
  %478 = vmatprep.subr.mxu0 0.0
  %479 = vmatpush1.msra.mxu0 0.0
  %480 = vmatprep.subr.mxu0 0.0
  %481 = vmatpush1.msra.mxu0 0.0
  %482 = vmatprep.subr.mxu0 0.0
  %483 = vmatpush1.msra.mxu0 0.0
  %484 = vmatprep.subr.mxu0 0.0
  %485 = vmatpush1.msra.mxu0 0.0
  %486 = vmatprep.subr.mxu0 0.0
  %487 = vmatpush1.msra.mxu0 0.0
  %488 = vmatprep.subr.mxu0 0.0
  %489 = vmatpush1.msra.mxu0 0.0
  %490 = vmatprep.subr.mxu0 0.0
  %491 = vmatpush1.msra.mxu0 0.0
  %492 = vmatprep.subr.mxu0 0.0
  %493 = vmatpush1.msra.mxu0 0.0
  %494 = vmatprep.subr.mxu0 0.0
  %495 = vmatpush1.msra.mxu0 0.0
  %496 = vmatprep.subr.mxu0 %v452
  %497 = vmatpush1.msra.mxu0 %v450
  %498 = vmatprep.subr.mxu0 0.0
  %499 = vmatpush2.msra.mxu0 0.0
  %500 = vmatprep.subr.mxu0 0.0
  %501 = vmatpush2.msra.mxu0 0.0
  %502 = vmatprep.subr.mxu0 0.0
  %503 = vmatpush2.msra.mxu0 0.0
  %504 = vmatprep.subr.mxu0 0.0
  %505 = vmatpush2.msra.mxu0 0.0
  %506 = vmatprep.subr.mxu0 0.0
  %507 = vmatpush2.msra.mxu0 0.0
  %508 = vmatprep.subr.mxu0 0.0
  %509 = vmatpush2.msra.mxu0 0.0
  %510 = vmatprep.subr.mxu0 0.0
  %511 = vmatpush2.msra.mxu0 0.0
  %512 = vmatprep.subr.mxu0 0.0
  %513 = vmatpush2.msra.mxu0 0.0
  %514 = vmatprep.subr.mxu0 0.0
  %515 = vmatpush2.msra.mxu0 0.0
  %516 = vmatprep.subr.mxu0 0.0
  %517 = vmatpush2.msra.mxu0 0.0
  %518 = vmatprep.subr.mxu0 0.0
  %519 = vmatpush2.msra.mxu0 0.0
  %520 = vmatprep.subr.mxu0 0.0
  %521 = vmatpush2.msra.mxu0 0.0
  %522 = vmatprep.subr.mxu0 0.0
  %523 = vmatpush2.msra.mxu0 0.0
  %524 = vmatprep.subr.mxu0 0.0
  %525 = vmatpush2.msra.mxu0 0.0
  %526 = vmatprep.subr.mxu0 0.0
  %527 = vmatpush2.msra.mxu0 0.0
  %528 = vmatprep.subr.mxu0 0.0
  %529 = vmatpush2.msra.mxu0 0.0
  %530 = vmatprep.mubr.f32.mxu0 0.0
  %531 = vmatmul.mubr.f32.gmra.mxu0 %v85
  %v532 = vpop.f32.mrf.mxu0
  %v533 = vadd.f32 0.0, %v532
  %v534 = vpop.f32.mrf.mxu0
  %v535 = vadd.f32 0.0, %v534
  %536 = vmatprep.mubr.f32.mxu0 0.0
  %537 = vmatmul.mubr.f32.gmra.mxu0 %v88
  %v538 = vpop.f32.mrf.mxu0
  %v539 = vadd.f32 0.0, %v538
  %v540 = vpop.f32.mrf.mxu0
  %v541 = vadd.f32 0.0, %v540
  %542 = vmatprep.mubr.f32.mxu0 0.0
  %543 = vmatmul.mubr.f32.gmra.mxu0 %v91
  %v544 = vpop.f32.mrf.mxu0
  %v545 = vadd.f32 0.0, %v544
  %v546 = vpop.f32.mrf.mxu0
  %v547 = vadd.f32 0.0, %v546
  %548 = vdwg.mxu0
  %549 = vmatprep.subr.mxu0 0.0
  %550 = vmatpush1.msra.mxu0 0.0
  %551 = vmatprep.subr.mxu0 0.0
  %552 = vmatpush1.msra.mxu0 0.0
  %553 = vmatprep.subr.mxu0 0.0
  %554 = vmatpush1.msra.mxu0 0.0
  %555 = vmatprep.subr.mxu0 0.0
  %556 = vmatpush1.msra.mxu0 0.0
  %557 = vmatprep.subr.mxu0 0.0
  %558 = vmatpush1.msra.mxu0 0.0
  %559 = vmatprep.subr.mxu0 0.0
  %560 = vmatpush1.msra.mxu0 0.0
  %561 = vmatprep.subr.mxu0 0.0
  %562 = vmatpush1.msra.mxu0 0.0
  %563 = vmatprep.subr.mxu0 0.0
  %564 = vmatpush1.msra.mxu0 0.0
  %565 = vmatprep.subr.mxu0 0.0
  %566 = vmatpush1.msra.mxu0 0.0
  %567 = vmatprep.subr.mxu0 0.0
  %568 = vmatpush1.msra.mxu0 0.0
  %569 = vmatprep.subr.mxu0 0.0
  %570 = vmatpush1.msra.mxu0 0.0
  %571 = vmatprep.subr.mxu0 0.0
  %572 = vmatpush1.msra.mxu0 0.0
  %573 = vmatprep.subr.mxu0 0.0
  %574 = vmatpush1.msra.mxu0 0.0
  %575 = vmatprep.subr.mxu0 0.0
  %576 = vmatpush1.msra.mxu0 0.0
  %577 = vmatprep.subr.mxu0 0.0
  %578 = vmatpush1.msra.mxu0 0.0
  %579 = vmatprep.subr.mxu0 %v456
  %580 = vmatpush1.msra.mxu0 %v454
  %581 = vmatprep.subr.mxu0 0.0
  %582 = vmatpush2.msra.mxu0 0.0
  %583 = vmatprep.subr.mxu0 0.0
  %584 = vmatpush2.msra.mxu0 0.0
  %585 = vmatprep.subr.mxu0 0.0
  %586 = vmatpush2.msra.mxu0 0.0
  %587 = vmatprep.subr.mxu0 0.0
  %588 = vmatpush2.msra.mxu0 0.0
  %589 = vmatprep.subr.mxu0 0.0
  %590 = vmatpush2.msra.mxu0 0.0
  %591 = vmatprep.subr.mxu0 0.0
  %592 = vmatpush2.msra.mxu0 0.0
  %593 = vmatprep.subr.mxu0 0.0
  %594 = vmatpush2.msra.mxu0 0.0
  %595 = vmatprep.subr.mxu0 0.0
  %596 = vmatpush2.msra.mxu0 0.0
  %597 = vmatprep.subr.mxu0 0.0
  %598 = vmatpush2.msra.mxu0 0.0
  %599 = vmatprep.subr.mxu0 0.0
  %600 = vmatpush2.msra.mxu0 0.0
  %601 = vmatprep.subr.mxu0 0.0
  %602 = vmatpush2.msra.mxu0 0.0
  %603 = vmatprep.subr.mxu0 0.0
  %604 = vmatpush2.msra.mxu0 0.0
  %605 = vmatprep.subr.mxu0 0.0
  %606 = vmatpush2.msra.mxu0 0.0
  %607 = vmatprep.subr.mxu0 0.0
  %608 = vmatpush2.msra.mxu0 0.0
  %609 = vmatprep.subr.mxu0 0.0
  %610 = vmatpush2.msra.mxu0 0.0
  %611 = vmatprep.subr.mxu0 0.0
  %612 = vmatpush2.msra.mxu0 0.0
  %613 = vmatprep.mubr.f32.mxu0 0.0
  %614 = vmatmul.mubr.f32.gmra.mxu0 %v85
  %v615 = vpop.f32.mrf.mxu0
  %v616 = vadd.f32 0.0, %v615
  %v617 = vpop.f32.mrf.mxu0
  %v618 = vadd.f32 0.0, %v617
  %619 = vmatprep.mubr.f32.mxu0 0.0
  %620 = vmatmul.mubr.f32.gmra.mxu0 %v88
  %v621 = vpop.f32.mrf.mxu0
  %v622 = vadd.f32 0.0, %v621
  %v623 = vpop.f32.mrf.mxu0
  %v624 = vadd.f32 0.0, %v623
  %625 = vmatprep.mubr.f32.mxu0 0.0
  %626 = vmatmul.mubr.f32.gmra.mxu0 %v91
  %v627 = vpop.f32.mrf.mxu0
  %v628 = vadd.f32 0.0, %v627
  %v629 = vpop.f32.mrf.mxu0
  %v630 = vadd.f32 0.0, %v629
  %631 = vdwg.mxu0
  %632 = vmatprep.subr.mxu0 0.0
  %633 = vmatpush1.msra.mxu0 0.0
  %634 = vmatprep.subr.mxu0 0.0
  %635 = vmatpush1.msra.mxu0 0.0
  %636 = vmatprep.subr.mxu0 0.0
  %637 = vmatpush1.msra.mxu0 0.0
  %638 = vmatprep.subr.mxu0 0.0
  %639 = vmatpush1.msra.mxu0 0.0
  %640 = vmatprep.subr.mxu0 0.0
  %641 = vmatpush1.msra.mxu0 0.0
  %642 = vmatprep.subr.mxu0 0.0
  %643 = vmatpush1.msra.mxu0 0.0
  %644 = vmatprep.subr.mxu0 0.0
  %645 = vmatpush1.msra.mxu0 0.0
  %646 = vmatprep.subr.mxu0 0.0
  %647 = vmatpush1.msra.mxu0 0.0
  %648 = vmatprep.subr.mxu0 0.0
  %649 = vmatpush1.msra.mxu0 0.0
  %650 = vmatprep.subr.mxu0 0.0
  %651 = vmatpush1.msra.mxu0 0.0
  %652 = vmatprep.subr.mxu0 0.0
  %653 = vmatpush1.msra.mxu0 0.0
  %654 = vmatprep.subr.mxu0 0.0
  %655 = vmatpush1.msra.mxu0 0.0
  %656 = vmatprep.subr.mxu0 0.0
  %657 = vmatpush1.msra.mxu0 0.0
  %658 = vmatprep.subr.mxu0 0.0
  %659 = vmatpush1.msra.mxu0 0.0
  %660 = vmatprep.subr.mxu0 0.0
  %661 = vmatpush1.msra.mxu0 0.0
  %662 = vmatprep.subr.mxu0 %v460
  %663 = vmatpush1.msra.mxu0 %v458
  %664 = vmatprep.subr.mxu0 0.0
  %665 = vmatpush2.msra.mxu0 0.0
  %666 = vmatprep.subr.mxu0 0.0
  %667 = vmatpush2.msra.mxu0 0.0
  %668 = vmatprep.subr.mxu0 0.0
  %669 = vmatpush2.msra.mxu0 0.0
  %670 = vmatprep.subr.mxu0 0.0
  %671 = vmatpush2.msra.mxu0 0.0
  %672 = vmatprep.subr.mxu0 0.0
  %673 = vmatpush2.msra.mxu0 0.0
  %674 = vmatprep.subr.mxu0 0.0
  %675 = vmatpush2.msra.mxu0 0.0
  %676 = vmatprep.subr.mxu0 0.0
  %677 = vmatpush2.msra.mxu0 0.0
  %678 = vmatprep.subr.mxu0 0.0
  %679 = vmatpush2.msra.mxu0 0.0
  %680 = vmatprep.subr.mxu0 0.0
  %681 = vmatpush2.msra.mxu0 0.0
  %682 = vmatprep.subr.mxu0 0.0
  %683 = vmatpush2.msra.mxu0 0.0
  %684 = vmatprep.subr.mxu0 0.0
  %685 = vmatpush2.msra.mxu0 0.0
  %686 = vmatprep.subr.mxu0 0.0
  %687 = vmatpush2.msra.mxu0 0.0
  %688 = vmatprep.subr.mxu0 0.0
  %689 = vmatpush2.msra.mxu0 0.0
  %690 = vmatprep.subr.mxu0 0.0
  %691 = vmatpush2.msra.mxu0 0.0
  %692 = vmatprep.subr.mxu0 0.0
  %693 = vmatpush2.msra.mxu0 0.0
  %694 = vmatprep.subr.mxu0 0.0
  %695 = vmatpush2.msra.mxu0 0.0
  %696 = vmatprep.mubr.f32.mxu0 0.0
  %697 = vmatmul.mubr.f32.gmra.mxu0 %v85
  %v698 = vpop.f32.mrf.mxu0
  %v699 = vadd.f32 0.0, %v698
  %v700 = vpop.f32.mrf.mxu0
  %v701 = vadd.f32 0.0, %v700
  %702 = vmatprep.mubr.f32.mxu0 0.0
  %703 = vmatmul.mubr.f32.gmra.mxu0 %v88
  %v704 = vpop.f32.mrf.mxu0
  %v705 = vadd.f32 0.0, %v704
  %v706 = vpop.f32.mrf.mxu0
  %v707 = vadd.f32 0.0, %v706
  %708 = vmatprep.mubr.f32.mxu0 0.0
  %709 = vmatmul.mubr.f32.gmra.mxu0 %v91
  %v710 = vpop.f32.mrf.mxu0
  %v711 = vadd.f32 0.0, %v710
  %v712 = vpop.f32.mrf.mxu0
  %v713 = vadd.f32 0.0, %v712
  %714 = vdwg.mxu0
  %715 = vmatprep.subr.mxu0 0.0
  %716 = vmatpush1.msra.mxu0 0.0
  %717 = vmatprep.subr.mxu0 0.0
  %718 = vmatpush1.msra.mxu0 0.0
  %719 = vmatprep.subr.mxu0 0.0
  %720 = vmatpush1.msra.mxu0 0.0
  %721 = vmatprep.subr.mxu0 0.0
  %722 = vmatpush1.msra.mxu0 0.0
  %723 = vmatprep.subr.mxu0 0.0
  %724 = vmatpush1.msra.mxu0 0.0
  %725 = vmatprep.subr.mxu0 0.0
  %726 = vmatpush1.msra.mxu0 0.0
  %727 = vmatprep.subr.mxu0 0.0
  %728 = vmatpush1.msra.mxu0 0.0
  %729 = vmatprep.subr.mxu0 0.0
  %730 = vmatpush1.msra.mxu0 0.0
  %731 = vmatprep.subr.mxu0 0.0
  %732 = vmatpush1.msra.mxu0 0.0
  %733 = vmatprep.subr.mxu0 0.0
  %734 = vmatpush1.msra.mxu0 0.0
  %735 = vmatprep.subr.mxu0 0.0
  %736 = vmatpush1.msra.mxu0 0.0
  %737 = vmatprep.subr.mxu0 0.0
  %738 = vmatpush1.msra.mxu0 0.0
  %739 = vmatprep.subr.mxu0 0.0
  %740 = vmatpush1.msra.mxu0 0.0
  %741 = vmatprep.subr.mxu0 0.0
  %742 = vmatpush1.msra.mxu0 0.0
  %743 = vmatprep.subr.mxu0 0.0
  %744 = vmatpush1.msra.mxu0 0.0
  %745 = vmatprep.subr.mxu0 %v464
  %746 = vmatpush1.msra.mxu0 %v462
  %747 = vmatprep.subr.mxu0 0.0
  %748 = vmatpush2.msra.mxu0 0.0
  %749 = vmatprep.subr.mxu0 0.0
  %750 = vmatpush2.msra.mxu0 0.0
  %751 = vmatprep.subr.mxu0 0.0
  %752 = vmatpush2.msra.mxu0 0.0
  %753 = vmatprep.subr.mxu0 0.0
  %754 = vmatpush2.msra.mxu0 0.0
  %755 = vmatprep.subr.mxu0 0.0
  %756 = vmatpush2.msra.mxu0 0.0
  %757 = vmatprep.subr.mxu0 0.0
  %758 = vmatpush2.msra.mxu0 0.0
  %759 = vmatprep.subr.mxu0 0.0
  %760 = vmatpush2.msra.mxu0 0.0
  %761 = vmatprep.subr.mxu0 0.0
  %762 = vmatpush2.msra.mxu0 0.0
  %763 = vmatprep.subr.mxu0 0.0
  %764 = vmatpush2.msra.mxu0 0.0
  %765 = vmatprep.subr.mxu0 0.0
  %766 = vmatpush2.msra.mxu0 0.0
  %767 = vmatprep.subr.mxu0 0.0
  %768 = vmatpush2.msra.mxu0 0.0
  %769 = vmatprep.subr.mxu0 0.0
  %770 = vmatpush2.msra.mxu0 0.0
  %771 = vmatprep.subr.mxu0 0.0
  %772 = vmatpush2.msra.mxu0 0.0
  %773 = vmatprep.subr.mxu0 0.0
  %774 = vmatpush2.msra.mxu0 0.0
  %775 = vmatprep.subr.mxu0 0.0
  %776 = vmatpush2.msra.mxu0 0.0
  %777 = vmatprep.subr.mxu0 0.0
  %778 = vmatpush2.msra.mxu0 0.0
  %779 = vmatprep.mubr.f32.mxu0 0.0
  %780 = vmatmul.mubr.f32.gmra.mxu0 %v85
  %v781 = vpop.f32.mrf.mxu0
  %v782 = vadd.f32 0.0, %v781
  %v783 = vpop.f32.mrf.mxu0
  %v784 = vadd.f32 0.0, %v783
  %785 = vmatprep.mubr.f32.mxu0 0.0
  %786 = vmatmul.mubr.f32.gmra.mxu0 %v88
  %v787 = vpop.f32.mrf.mxu0
  %v788 = vadd.f32 0.0, %v787
  %v789 = vpop.f32.mrf.mxu0
  %v790 = vadd.f32 0.0, %v789
  %791 = vmatprep.mubr.f32.mxu0 0.0
  %792 = vmatmul.mubr.f32.gmra.mxu0 %v91
  %v793 = vpop.f32.mrf.mxu0
  %v794 = vadd.f32 0.0, %v793
  %v795 = vpop.f32.mrf.mxu0
  %v796 = vadd.f32 0.0, %v795
  %797 = vdwg.mxu0
  %v798 = vmul.f32 %v14, %v177
  %v799 = vmul.f32 %v15, %v179
  %v800 = vmul.f32 %v16, %v260
  %v801 = vmul.f32 %v17, %v262
  %v802 = vmul.f32 %v18, %v343
  %v803 = vmul.f32 %v19, %v345
  %v804 = vmul.f32 %v20, %v426
  %v805 = vmul.f32 %v21, %v428
  %v806 = vmul.f32 %v22, %v183
  %v807 = vmul.f32 %v23, %v185
  %v808 = vmul.f32 %v24, %v266
  %v809 = vmul.f32 %v25, %v268
  %v810 = vmul.f32 %v26, %v349
  %v811 = vmul.f32 %v27, %v351
  %v812 = vmul.f32 %v28, %v432
  %v813 = vmul.f32 %v29, %v434
  %v814 = vmul.f32 %v30, %v189
  %v815 = vmul.f32 %v31, %v191
  %v816 = vmul.f32 %v32, %v272
  %v817 = vmul.f32 %v33, %v274
  %v818 = vmul.f32 %v34, %v355
  %v819 = vmul.f32 %v35, %v357
  %v820 = vmul.f32 %v36, %v438
  %v821 = vmul.f32 %v37, %v440
  %v822 = vmul.f32 %v39, %v533
  %v823 = vmul.f32 %v40, %v535
  %v824 = vmul.f32 %v41, %v616
  %v825 = vmul.f32 %v42, %v618
  %v826 = vmul.f32 %v43, %v699
  %v827 = vmul.f32 %v44, %v701
  %v828 = vmul.f32 %v45, %v782
  %v829 = vmul.f32 %v46, %v784
  %v830 = vmul.f32 %v47, %v539
  %v831 = vmul.f32 %v48, %v541
  %v832 = vmul.f32 %v49, %v622
  %v833 = vmul.f32 %v50, %v624
  %v834 = vmul.f32 %v51, %v705
  %v835 = vmul.f32 %v52, %v707
  %v836 = vmul.f32 %v53, %v788
  %v837 = vmul.f32 %v54, %v790
  %v838 = vmul.f32 %v55, %v545
  %v839 = vmul.f32 %v56, %v547
  %v840 = vmul.f32 %v57, %v628
  %v841 = vmul.f32 %v58, %v630
  %v842 = vmul.f32 %v59, %v711
  %v843 = vmul.f32 %v60, %v713
  %v844 = vmul.f32 %v61, %v794
  %v845 = vmul.f32 %v62, %v796
  %v846 = vsub.f32 %v798, %v822
  %v847 = vsub.f32 %v799, %v823
  %v848 = vsub.f32 %v800, %v824
  %v849 = vsub.f32 %v801, %v825
  %v850 = vsub.f32 %v802, %v826
  %v851 = vsub.f32 %v803, %v827
  %v852 = vsub.f32 %v804, %v828
  %v853 = vsub.f32 %v805, %v829
  %v854 = vsub.f32 %v806, %v830
  %v855 = vsub.f32 %v807, %v831
  %v856 = vsub.f32 %v808, %v832
  %v857 = vsub.f32 %v809, %v833
  %v858 = vsub.f32 %v810, %v834
  %v859 = vsub.f32 %v811, %v835
  %v860 = vsub.f32 %v812, %v836
  %v861 = vsub.f32 %v813, %v837
  %v862 = vsub.f32 %v814, %v838
  %v863 = vsub.f32 %v815, %v839
  %v864 = vsub.f32 %v816, %v840
  %v865 = vsub.f32 %v817, %v841
  %v866 = vsub.f32 %v818, %v842
  %v867 = vsub.f32 %v819, %v843
  %v868 = vsub.f32 %v820, %v844
  %v869 = vsub.f32 %v821, %v845
  %870 = vst [vmem:[%s3] sm:$0xff] %v846
  %871 = vst [vmem:[%s3 + $0x8] sm:$0xff] %v847
  %872 = vst [vmem:[%s3 + $0x10] sm:$0xff] %v848
  %873 = vst [vmem:[%s3 + $0x18] sm:$0xff] %v849
  %874 = vst [vmem:[%s3 + $0x20] sm:$0xff] %v850
  %875 = vst [vmem:[%s3 + $0x28] sm:$0xff] %v851
  %876 = vst [vmem:[%s3 + $0x30] sm:$0xff] %v852
  %877 = vst [vmem:[%s3 + $0x38] sm:$0xff] %v853
  %878 = vst [vmem:[%s3 + $0x40] sm:$0xff] %v854
  %879 = vst [vmem:[%s3 + $0x48] sm:$0xff] %v855
  %880 = vst [vmem:[%s3 + $0x50] sm:$0xff] %v856
  %881 = vst [vmem:[%s3 + $0x58] sm:$0xff] %v857
  %882 = vst [vmem:[%s3 + $0x60] sm:$0xff] %v858
  %883 = vst [vmem:[%s3 + $0x68] sm:$0xff] %v859
  %884 = vst [vmem:[%s3 + $0x70] sm:$0xff] %v860
  %885 = vst [vmem:[%s3 + $0x78] sm:$0xff] %v861
  %886 = vst [vmem:[%s3 + $0x80] sm:$0x7] %v862
  %887 = vst [vmem:[%s3 + $0x88] sm:$0x7] %v863
  %888 = vst [vmem:[%s3 + $0x90] sm:$0x7] %v864
  %889 = vst [vmem:[%s3 + $0x98] sm:$0x7] %v865
  %890 = vst [vmem:[%s3 + $0xa0] sm:$0x7] %v866
  %891 = vst [vmem:[%s3 + $0xa8] sm:$0x7] %v867
  %892 = vst [vmem:[%s3 + $0xb0] sm:$0x7] %v868
  %893 = vst [vmem:[%s3 + $0xb8] sm:$0x7] %v869
  %v894 = vmul.f32 %v14, %v533
  %v895 = vmul.f32 %v15, %v535
  %v896 = vmul.f32 %v16, %v616
  %v897 = vmul.f32 %v17, %v618
  %v898 = vmul.f32 %v18, %v699
  %v899 = vmul.f32 %v19, %v701
  %v900 = vmul.f32 %v20, %v782
  %v901 = vmul.f32 %v21, %v784
  %v902 = vmul.f32 %v22, %v539
  %v903 = vmul.f32 %v23, %v541
  %v904 = vmul.f32 %v24, %v622
  %v905 = vmul.f32 %v25, %v624
  %v906 = vmul.f32 %v26, %v705
  %v907 = vmul.f32 %v27, %v707
  %v908 = vmul.f32 %v28, %v788
  %v909 = vmul.f32 %v29, %v790
  %v910 = vmul.f32 %v30, %v545
  %v911 = vmul.f32 %v31, %v547
  %v912 = vmul.f32 %v32, %v628
  %v913 = vmul.f32 %v33, %v630
  %v914 = vmul.f32 %v34, %v711
  %v915 = vmul.f32 %v35, %v713
  %v916 = vmul.f32 %v36, %v794
  %v917 = vmul.f32 %v37, %v796
  %v918 = vmul.f32 %v39, %v177
  %v919 = vmul.f32 %v40, %v179
  %v920 = vmul.f32 %v41, %v260
  %v921 = vmul.f32 %v42, %v262
  %v922 = vmul.f32 %v43, %v343
  %v923 = vmul.f32 %v44, %v345
  %v924 = vmul.f32 %v45, %v426
  %v925 = vmul.f32 %v46, %v428
  %v926 = vmul.f32 %v47, %v183
  %v927 = vmul.f32 %v48, %v185
  %v928 = vmul.f32 %v49, %v266
  %v929 = vmul.f32 %v50, %v268
  %v930 = vmul.f32 %v51, %v349
  %v931 = vmul.f32 %v52, %v351
  %v932 = vmul.f32 %v53, %v432
  %v933 = vmul.f32 %v54, %v434
  %v934 = vmul.f32 %v55, %v189
  %v935 = vmul.f32 %v56, %v191
  %v936 = vmul.f32 %v57, %v272
  %v937 = vmul.f32 %v58, %v274
  %v938 = vmul.f32 %v59, %v355
  %v939 = vmul.f32 %v60, %v357
  %v940 = vmul.f32 %v61, %v438
  %v941 = vmul.f32 %v62, %v440
  %v942 = vadd.f32 %v894, %v918
  %v943 = vadd.f32 %v895, %v919
  %v944 = vadd.f32 %v896, %v920
  %v945 = vadd.f32 %v897, %v921
  %v946 = vadd.f32 %v898, %v922
  %v947 = vadd.f32 %v899, %v923
  %v948 = vadd.f32 %v900, %v924
  %v949 = vadd.f32 %v901, %v925
  %v950 = vadd.f32 %v902, %v926
  %v951 = vadd.f32 %v903, %v927
  %v952 = vadd.f32 %v904, %v928
  %v953 = vadd.f32 %v905, %v929
  %v954 = vadd.f32 %v906, %v930
  %v955 = vadd.f32 %v907, %v931
  %v956 = vadd.f32 %v908, %v932
  %v957 = vadd.f32 %v909, %v933
  %v958 = vadd.f32 %v910, %v934
  %v959 = vadd.f32 %v911, %v935
  %v960 = vadd.f32 %v912, %v936
  %v961 = vadd.f32 %v913, %v937
  %v962 = vadd.f32 %v914, %v938
  %v963 = vadd.f32 %v915, %v939
  %v964 = vadd.f32 %v916, %v940
  %v965 = vadd.f32 %v917, %v941
  %s966 = scalar_lea.vmem %s3, 192
  %967 = vst [vmem:[%s966] sm:$0xff] %v942
  %968 = vst [vmem:[%s966 + $0x8] sm:$0xff] %v943
  %969 = vst [vmem:[%s966 + $0x10] sm:$0xff] %v944
  %970 = vst [vmem:[%s966 + $0x18] sm:$0xff] %v945
  %971 = vst [vmem:[%s966 + $0x20] sm:$0xff] %v946
  %972 = vst [vmem:[%s966 + $0x28] sm:$0xff] %v947
  %973 = vst [vmem:[%s966 + $0x30] sm:$0xff] %v948
  %974 = vst [vmem:[%s966 + $0x38] sm:$0xff] %v949
  %975 = vst [vmem:[%s966 + $0x40] sm:$0xff] %v950
  %976 = vst [vmem:[%s966 + $0x48] sm:$0xff] %v951
  %977 = vst [vmem:[%s966 + $0x50] sm:$0xff] %v952
  %978 = vst [vmem:[%s966 + $0x58] sm:$0xff] %v953
  %979 = vst [vmem:[%s966 + $0x60] sm:$0xff] %v954
  %980 = vst [vmem:[%s966 + $0x68] sm:$0xff] %v955
  %981 = vst [vmem:[%s966 + $0x70] sm:$0xff] %v956
  %982 = vst [vmem:[%s966 + $0x78] sm:$0xff] %v957
  %983 = vst [vmem:[%s966 + $0x80] sm:$0x7] %v958
  %984 = vst [vmem:[%s966 + $0x88] sm:$0x7] %v959
  %985 = vst [vmem:[%s966 + $0x90] sm:$0x7] %v960
  %986 = vst [vmem:[%s966 + $0x98] sm:$0x7] %v961
  %987 = vst [vmem:[%s966 + $0xa0] sm:$0x7] %v962
  %988 = vst [vmem:[%s966 + $0xa8] sm:$0x7] %v963
  %989 = vst [vmem:[%s966 + $0xb0] sm:$0x7] %v964
  %990 = vst [vmem:[%s966 + $0xb8] sm:$0x7] %v965
  // Predicated region
  $region14: #{lenia_forward.2} parent=0 // pred_check
    _
  $region15: #{lenia_forward.2} parent=0 // pred_check_branch
    %992 = sbr.rel (0) target = $region17
  $region16: #{lenia_forward.2} parent=0 // pred_region
    _
  $region17: #{lenia_forward.2} parent=0 // pred_fallthru
    _
  // Predicated region
  $region18: #{lenia_forward.2} parent=0 // pred_check
    _
  $region19: #{lenia_forward.2} parent=0 // pred_check_branch
    %994 = sbr.rel (0) target = $region21
  $region20: #{lenia_forward.2} parent=0 // pred_region
    _
  $region21: #{lenia_forward.2} parent=0 // pred_fallthru
    _

// kernel: reverse.1
$region0: #{reverse.1}
  #allocation0 [shape = 's32[1]{0}', space=sflag, size = 0x4, scoped, tag = 'scoped memory for reverse.1']
  %s0 = inlined_call_operand.vmem [shape: f32[19,32,15], index: 0, kind: input, shape index: {}]
  %s1 = inlined_call_operand.vmem [shape: f32[19,32,15], index: 1, kind: output, shape index: {}]
  %s2 = scalar_lea.vmem %s0, 336
  %v3 = vld [vmem:[%s2] sm:$0xff]
  %4 = vst [vmem:[%s1] sm:$0xff] %v3
  %s5 = scalar_lea.vmem %s0, 312
  %v6 = vld [vmem:[%s5] sm:$0xff]
  %s7 = scalar_lea.vmem %s1, 24
  %8 = vst [vmem:[%s7] sm:$0xff] %v6
  %s9 = scalar_lea.vmem %s0, 288
  %v10 = vld [vmem:[%s9] sm:$0xff]
  %s11 = scalar_lea.vmem %s1, 48
  %12 = vst [vmem:[%s11] sm:$0xff] %v10
  %s13 = scalar_lea.vmem %s0, 264
  %v14 = vld [vmem:[%s13] sm:$0xff]
  %s15 = scalar_lea.vmem %s1, 72
  %16 = vst [vmem:[%s15] sm:$0xff] %v14
  %s17 = scalar_lea.vmem %s0, 240
  %v18 = vld [vmem:[%s17] sm:$0xff]
  %s19 = scalar_lea.vmem %s1, 96
  %20 = vst [vmem:[%s19] sm:$0xff] %v18
  %s21 = scalar_lea.vmem %s0, 216
  %v22 = vld [vmem:[%s21] sm:$0xff]
  %s23 = scalar_lea.vmem %s1, 120
  %24 = vst [vmem:[%s23] sm:$0xff] %v22
  %s25 = scalar_lea.vmem %s0, 192
  %v26 = vld [vmem:[%s25] sm:$0xff]
  %s27 = scalar_lea.vmem %s1, 144
  %28 = vst [vmem:[%s27] sm:$0xff] %v26
  %s29 = scalar_lea.vmem %s0, 168
  %v30 = vld [vmem:[%s29] sm:$0xff]
  %s31 = scalar_lea.vmem %s1, 168
  %32 = vst [vmem:[%s31] sm:$0xff] %v30
  %s33 = scalar_lea.vmem %s0, 144
  %v34 = vld [vmem:[%s33] sm:$0xff]
  %s35 = scalar_lea.vmem %s1, 192
  %36 = vst [vmem:[%s35] sm:$0xff] %v34
  %s37 = scalar_lea.vmem %s0, 120
  %v38 = vld [vmem:[%s37] sm:$0xff]
  %s39 = scalar_lea.vmem %s1, 216
  %40 = vst [vmem:[%s39] sm:$0xff] %v38
  %s41 = scalar_lea.vmem %s0, 96
  %v42 = vld [vmem:[%s41] sm:$0xff]
  %s43 = scalar_lea.vmem %s1, 240
  %44 = vst [vmem:[%s43] sm:$0xff] %v42
  %s45 = scalar_lea.vmem %s0, 72
  %v46 = vld [vmem:[%s45] sm:$0xff]
  %s47 = scalar_lea.vmem %s1, 264
  %48 = vst [vmem:[%s47] sm:$0xff] %v46
  %s49 = scalar_lea.vmem %s0, 48
  %v50 = vld [vmem:[%s49] sm:$0xff]
  %s51 = scalar_lea.vmem %s1, 288
  %52 = vst [vmem:[%s51] sm:$0xff] %v50
  %s53 = scalar_lea.vmem %s0, 24
  %v54 = vld [vmem:[%s53] sm:$0xff]
  %s55 = scalar_lea.vmem %s1, 312
  %56 = vst [vmem:[%s55] sm:$0xff] %v54
  %v57 = vld [vmem:[%s0] sm:$0xff]
  %s58 = scalar_lea.vmem %s1, 336
  %59 = vst [vmem:[%s58] sm:$0xff] %v57
  %s60 = scalar_lea.vmem %s0, 344
  %v61 = vld [vmem:[%s60] sm:$0xff]
  %s62 = scalar_lea.vmem %s1, 8
  %63 = vst [vmem:[%s62] sm:$0xff] %v61
  %s64 = scalar_lea.vmem %s0, 320
  %v65 = vld [vmem:[%s64] sm:$0xff]
  %s66 = scalar_lea.vmem %s1, 32
  %67 = vst [vmem:[%s66] sm:$0xff] %v65
  %s68 = scalar_lea.vmem %s0, 296
  %v69 = vld [vmem:[%s68] sm:$0xff]
  %s70 = scalar_lea.vmem %s1, 56
  %71 = vst [vmem:[%s70] sm:$0xff] %v69
  %s72 = scalar_lea.vmem %s0, 272
  %v73 = vld [vmem:[%s72] sm:$0xff]
  %s74 = scalar_lea.vmem %s1, 80
  %75 = vst [vmem:[%s74] sm:$0xff] %v73
  %s76 = scalar_lea.vmem %s0, 248
  %v77 = vld [vmem:[%s76] sm:$0xff]
  %s78 = scalar_lea.vmem %s1, 104
  %79 = vst [vmem:[%s78] sm:$0xff] %v77
  %s80 = scalar_lea.vmem %s0, 224
  %v81 = vld [vmem:[%s80] sm:$0xff]
  %s82 = scalar_lea.vmem %s1, 128
  %83 = vst [vmem:[%s82] sm:$0xff] %v81
  %s84 = scalar_lea.vmem %s0, 200
  %v85 = vld [vmem:[%s84] sm:$0xff]
  %s86 = scalar_lea.vmem %s1, 152
  %87 = vst [vmem:[%s86] sm:$0xff] %v85
  %s88 = scalar_lea.vmem %s0, 176
  %v89 = vld [vmem:[%s88] sm:$0xff]
  %s90 = scalar_lea.vmem %s1, 176
  %91 = vst [vmem:[%s90] sm:$0xff] %v89
  %s92 = scalar_lea.vmem %s0, 152
  %v93 = vld [vmem:[%s92] sm:$0xff]
  %s94 = scalar_lea.vmem %s1, 200
  %95 = vst [vmem:[%s94] sm:$0xff] %v93
  %s96 = scalar_lea.vmem %s0, 128
  %v97 = vld [vmem:[%s96] sm:$0xff]
  %s98 = scalar_lea.vmem %s1, 224
  %99 = vst [vmem:[%s98] sm:$0xff] %v97
  %s100 = scalar_lea.vmem %s0, 104
  %v101 = vld [vmem:[%s100] sm:$0xff]
  %s102 = scalar_lea.vmem %s1, 248
  %103 = vst [vmem:[%s102] sm:$0xff] %v101
  %s104 = scalar_lea.vmem %s0, 80
  %v105 = vld [vmem:[%s104] sm:$0xff]
  %s106 = scalar_lea.vmem %s1, 272
  %107 = vst [vmem:[%s106] sm:$0xff] %v105
  %s108 = scalar_lea.vmem %s0, 56
  %v109 = vld [vmem:[%s108] sm:$0xff]
  %s110 = scalar_lea.vmem %s1, 296
  %111 = vst [vmem:[%s110] sm:$0xff] %v109
  %s112 = scalar_lea.vmem %s0, 32
  %v113 = vld [vmem:[%s112] sm:$0xff]
  %s114 = scalar_lea.vmem %s1, 320
  %115 = vst [vmem:[%s114] sm:$0xff] %v113
  %s116 = scalar_lea.vmem %s0, 8
  %v117 = vld [vmem:[%s116] sm:$0xff]
  %s118 = scalar_lea.vmem %s1, 344
  %119 = vst [vmem:[%s118] sm:$0xff] %v117
  %s120 = scalar_lea.vmem %s0, 352
  %v121 = vld [vmem:[%s120] sm:$0xff]
  %s122 = scalar_lea.vmem %s1, 16
  %123 = vst [vmem:[%s122] sm:$0xff] %v121
  %s124 = scalar_lea.vmem %s0, 328
  %v125 = vld [vmem:[%s124] sm:$0xff]
  %s126 = scalar_lea.vmem %s1, 40
  %127 = vst [vmem:[%s126] sm:$0xff] %v125
  %s128 = scalar_lea.vmem %s0, 304
  %v129 = vld [vmem:[%s128] sm:$0xff]
  %s130 = scalar_lea.vmem %s1, 64
  %131 = vst [vmem:[%s130] sm:$0xff] %v129
  %s132 = scalar_lea.vmem %s0, 280
  %v133 = vld [vmem:[%s132] sm:$0xff]
  %s134 = scalar_lea.vmem %s1, 88
  %135 = vst [vmem:[%s134] sm:$0xff] %v133
  %s136 = scalar_lea.vmem %s0, 256
  %v137 = vld [vmem:[%s136] sm:$0xff]
  %s138 = scalar_lea.vmem %s1, 112
  %139 = vst [vmem:[%s138] sm:$0xff] %v137
  %s140 = scalar_lea.vmem %s0, 232
  %v141 = vld [vmem:[%s140] sm:$0xff]
  %s142 = scalar_lea.vmem %s1, 136
  %143 = vst [vmem:[%s142] sm:$0xff] %v141
  %s144 = scalar_lea.vmem %s0, 208
  %v145 = vld [vmem:[%s144] sm:$0xff]
  %s146 = scalar_lea.vmem %s1, 160
  %147 = vst [vmem:[%s146] sm:$0xff] %v145
  %s148 = scalar_lea.vmem %s0, 184
  %v149 = vld [vmem:[%s148] sm:$0xff]
  %s150 = scalar_lea.vmem %s1, 184
  %151 = vst [vmem:[%s150] sm:$0xff] %v149
  %s152 = scalar_lea.vmem %s0, 160
  %v153 = vld [vmem:[%s152] sm:$0xff]
  %s154 = scalar_lea.vmem %s1, 208
  %155 = vst [vmem:[%s154] sm:$0xff] %v153
  %s156 = scalar_lea.vmem %s0, 136
  %v157 = vld [vmem:[%s156] sm:$0xff]
  %s158 = scalar_lea.vmem %s1, 232
  %159 = vst [vmem:[%s158] sm:$0xff] %v157
  %s160 = scalar_lea.vmem %s0, 112
  %v161 = vld [vmem:[%s160] sm:$0xff]
  %s162 = scalar_lea.vmem %s1, 256
  %163 = vst [vmem:[%s162] sm:$0xff] %v161
  %s164 = scalar_lea.vmem %s0, 88
  %v165 = vld [vmem:[%s164] sm:$0xff]
  %s166 = scalar_lea.vmem %s1, 280
  %167 = vst [vmem:[%s166] sm:$0xff] %v165
  %s168 = scalar_lea.vmem %s0, 64
  %v169 = vld [vmem:[%s168] sm:$0xff]
  %s170 = scalar_lea.vmem %s1, 304
  %171 = vst [vmem:[%s170] sm:$0xff] %v169
  %s172 = scalar_lea.vmem %s0, 40
  %v173 = vld [vmem:[%s172] sm:$0xff]
  %s174 = scalar_lea.vmem %s1, 328
  %175 = vst [vmem:[%s174] sm:$0xff] %v173
  %s176 = scalar_lea.vmem %s0, 16
  %v177 = vld [vmem:[%s176] sm:$0xff]
  %s178 = scalar_lea.vmem %s1, 352
  %179 = vst [vmem:[%s178] sm:$0xff] %v177

// kernel: lenia_forward.3
$region0: #{lenia_forward.3}
  #allocation0 [shape = 'u32[]', space=smem, size = 0x4, offset = 0x4, fixed_abs, tag = 'smem constant byte address 0x4 - core index']
  #allocation1 [shape = 'u32[144,128]{1,0:T(1,128)}', space=vmem, size = 0x12000, scoped, tag = 'internal scratch']
  %s0 = inlined_call_operand.vmem [shape: f32[19,1024], index: 0, kind: input, shape index: {}]
  %s1 = inlined_call_operand.vmem [shape: f32[4,1024], index: 1, kind: input, shape index: {}, may-alias: {1,6}]
  %s2 = inlined_call_operand.vmem [shape: f32[19,1024], index: 2, kind: input, shape index: {}]
  %s3 = inlined_call_operand.vmem [shape: f32[19,1024], index: 3, kind: input, shape index: {}]
  %s4 = inlined_call_operand.vmem [shape: f32[4,19], index: 4, kind: input, shape index: {}]
  %s5 = inlined_call_operand.vmem [shape: f32[4,1024], index: 5, kind: input, shape index: {}]
  %s6 = inlined_call_operand.vmem [shape: f32[4,1024], index: 6, kind: output, shape index: {}, may-alias: {1,6}]
  %s7 = sld [smem:[#allocation0]]
  $region34: #{lenia_forward.3} parent=0
    _
  %s9 = ssub.s32 1, %s7
  %s10 = scalar_select 0, %s9, %s7
  // Predicated region
  $region2: #{lenia_forward.3} parent=0 // pred_check
    _
  $region3: #{lenia_forward.3} parent=0 // pred_check_branch
    %12 = sbr.rel (0) target = $region5
  $region4: #{lenia_forward.3} parent=0 // pred_region
    _
  $region5: #{lenia_forward.3} parent=0 // pred_fallthru
    _
  // Predicated region
  $region6: #{lenia_forward.3} parent=0 // pred_check
    _
  $region7: #{lenia_forward.3} parent=0 // pred_check_branch
    %14 = sbr.rel (0) target = $region9
  $region8: #{lenia_forward.3} parent=0 // pred_region
    _
  $region9: #{lenia_forward.3} parent=0 // pred_fallthru
    _
  // Predicated region
  $region10: #{lenia_forward.3} parent=0 // pred_check
    _
  $region11: #{lenia_forward.3} parent=0 // pred_check_branch
    %16 = sbr.rel (0) target = $region13
  $region12: #{lenia_forward.3} parent=0 // pred_region
    _
  $region13: #{lenia_forward.3} parent=0 // pred_fallthru
    _
  // Predicated region
  $region14: #{lenia_forward.3} parent=0 // pred_check
    _
  $region15: #{lenia_forward.3} parent=0 // pred_check_branch
    %18 = sbr.rel (0) target = $region17
  $region16: #{lenia_forward.3} parent=0 // pred_region
    _
  $region17: #{lenia_forward.3} parent=0 // pred_fallthru
    _
  // Predicated region
  $region18: #{lenia_forward.3} parent=0 // pred_check
    _
  $region19: #{lenia_forward.3} parent=0 // pred_check_branch
    %20 = sbr.rel (0) target = $region21
  $region20: #{lenia_forward.3} parent=0 // pred_region
    _
  $region21: #{lenia_forward.3} parent=0 // pred_fallthru
    _
  // Predicated region
  $region22: #{lenia_forward.3} parent=0 // pred_check
    _
  $region23: #{lenia_forward.3} parent=0 // pred_check_branch
    %22 = sbr.rel (0) target = $region25
  $region24: #{lenia_forward.3} parent=0 // pred_region
    _
  $region25: #{lenia_forward.3} parent=0 // pred_fallthru
    _
  %v23 = vld [vmem:[%s0] sm:$0xff]
  %v24 = vld [vmem:[%s0 + $0x8] sm:$0xff]
  %v25 = vld [vmem:[%s0 + $0x10] sm:$0xff]
  %v26 = vld [vmem:[%s0 + $0x18] sm:$0xff]
  %v27 = vld [vmem:[%s0 + $0x20] sm:$0xff]
  %v28 = vld [vmem:[%s0 + $0x28] sm:$0xff]
  %v29 = vld [vmem:[%s0 + $0x30] sm:$0xff]
  %v30 = vld [vmem:[%s0 + $0x38] sm:$0xff]
  %v31 = vld [vmem:[%s0 + $0x40] sm:$0xff]
  %v32 = vld [vmem:[%s0 + $0x48] sm:$0xff]
  %v33 = vld [vmem:[%s0 + $0x50] sm:$0xff]
  %v34 = vld [vmem:[%s0 + $0x58] sm:$0xff]
  %v35 = vld [vmem:[%s0 + $0x60] sm:$0xff]
  %v36 = vld [vmem:[%s0 + $0x68] sm:$0xff]
  %v37 = vld [vmem:[%s0 + $0x70] sm:$0xff]
  %v38 = vld [vmem:[%s0 + $0x78] sm:$0xff]
  %v39 = vld [vmem:[%s0 + $0x80] sm:$0x7]
  %v40 = vld [vmem:[%s0 + $0x88] sm:$0x7]
  %v41 = vld [vmem:[%s0 + $0x90] sm:$0x7]
  %v42 = vld [vmem:[%s0 + $0x98] sm:$0x7]
  %v43 = vld [vmem:[%s0 + $0xa0] sm:$0x7]
  %v44 = vld [vmem:[%s0 + $0xa8] sm:$0x7]
  %v45 = vld [vmem:[%s0 + $0xb0] sm:$0x7]
  %v46 = vld [vmem:[%s0 + $0xb8] sm:$0x7]
  %v47 = vld [vmem:[%s2] sm:$0xff]
  %v48 = vld [vmem:[%s2 + $0x8] sm:$0xff]
  %v49 = vld [vmem:[%s2 + $0x10] sm:$0xff]
  %v50 = vld [vmem:[%s2 + $0x18] sm:$0xff]
  %v51 = vld [vmem:[%s2 + $0x20] sm:$0xff]
  %v52 = vld [vmem:[%s2 + $0x28] sm:$0xff]
  %v53 = vld [vmem:[%s2 + $0x30] sm:$0xff]
  %v54 = vld [vmem:[%s2 + $0x38] sm:$0xff]
  %v55 = vld [vmem:[%s2 + $0x40] sm:$0xff]
  %v56 = vld [vmem:[%s2 + $0x48] sm:$0xff]
  %v57 = vld [vmem:[%s2 + $0x50] sm:$0xff]
  %v58 = vld [vmem:[%s2 + $0x58] sm:$0xff]
  %v59 = vld [vmem:[%s2 + $0x60] sm:$0xff]
  %v60 = vld [vmem:[%s2 + $0x68] sm:$0xff]
  %v61 = vld [vmem:[%s2 + $0x70] sm:$0xff]
  %v62 = vld [vmem:[%s2 + $0x78] sm:$0xff]
  %v63 = vld [vmem:[%s2 + $0x80] sm:$0x7]
  %v64 = vld [vmem:[%s2 + $0x88] sm:$0x7]
  %v65 = vld [vmem:[%s2 + $0x90] sm:$0x7]
  %v66 = vld [vmem:[%s2 + $0x98] sm:$0x7]
  %v67 = vld [vmem:[%s2 + $0xa0] sm:$0x7]
  %v68 = vld [vmem:[%s2 + $0xa8] sm:$0x7]
  %v69 = vld [vmem:[%s2 + $0xb0] sm:$0x7]
  %v70 = vld [vmem:[%s2 + $0xb8] sm:$0x7]
  %v71 = vsub.f32 %v23, %v47
  %v72 = vsub.f32 %v24, %v48
  %v73 = vsub.f32 %v25, %v49
  %v74 = vsub.f32 %v26, %v50
  %v75 = vsub.f32 %v27, %v51
  %v76 = vsub.f32 %v28, %v52
  %v77 = vsub.f32 %v29, %v53
  %v78 = vsub.f32 %v30, %v54
  %v79 = vsub.f32 %v31, %v55
  %v80 = vsub.f32 %v32, %v56
  %v81 = vsub.f32 %v33, %v57
  %v82 = vsub.f32 %v34, %v58
  %v83 = vsub.f32 %v35, %v59
  %v84 = vsub.f32 %v36, %v60
  %v85 = vsub.f32 %v37, %v61
  %v86 = vsub.f32 %v38, %v62
  %v87 = vsub.f32 %v39, %v63
  %v88 = vsub.f32 %v40, %v64
  %v89 = vsub.f32 %v41, %v65
  %v90 = vsub.f32 %v42, %v66
  %v91 = vsub.f32 %v43, %v67
  %v92 = vsub.f32 %v44, %v68
  %v93 = vsub.f32 %v45, %v69
  %v94 = vsub.f32 %v46, %v70
  %v95 = vmul.f32 %v71, %v71
  %v96 = vmul.f32 %v72, %v72
  %v97 = vmul.f32 %v73, %v73
  %v98 = vmul.f32 %v74, %v74
  %v99 = vmul.f32 %v75, %v75
  %v100 = vmul.f32 %v76, %v76
  %v101 = vmul.f32 %v77, %v77
  %v102 = vmul.f32 %v78, %v78
  %v103 = vmul.f32 %v79, %v79
  %v104 = vmul.f32 %v80, %v80
  %v105 = vmul.f32 %v81, %v81
  %v106 = vmul.f32 %v82, %v82
  %v107 = vmul.f32 %v83, %v83
  %v108 = vmul.f32 %v84, %v84
  %v109 = vmul.f32 %v85, %v85
  %v110 = vmul.f32 %v86, %v86
  %v111 = vmul.f32 %v87, %v87
  %v112 = vmul.f32 %v88, %v88
  %v113 = vmul.f32 %v89, %v89
  %v114 = vmul.f32 %v90, %v90
  %v115 = vmul.f32 %v91, %v91
  %v116 = vmul.f32 %v92, %v92
  %v117 = vmul.f32 %v93, %v93
  %v118 = vmul.f32 %v94, %v94
  %v119 = vld [vmem:[%s3] sm:$0xff]
  %v120 = vld [vmem:[%s3 + $0x8] sm:$0xff]
  %v121 = vld [vmem:[%s3 + $0x10] sm:$0xff]
  %v122 = vld [vmem:[%s3 + $0x18] sm:$0xff]
  %v123 = vld [vmem:[%s3 + $0x20] sm:$0xff]
  %v124 = vld [vmem:[%s3 + $0x28] sm:$0xff]
  %v125 = vld [vmem:[%s3 + $0x30] sm:$0xff]
  %v126 = vld [vmem:[%s3 + $0x38] sm:$0xff]
  %v127 = vld [vmem:[%s3 + $0x40] sm:$0xff]
  %v128 = vld [vmem:[%s3 + $0x48] sm:$0xff]
  %v129 = vld [vmem:[%s3 + $0x50] sm:$0xff]
  %v130 = vld [vmem:[%s3 + $0x58] sm:$0xff]
  %v131 = vld [vmem:[%s3 + $0x60] sm:$0xff]
  %v132 = vld [vmem:[%s3 + $0x68] sm:$0xff]
  %v133 = vld [vmem:[%s3 + $0x70] sm:$0xff]
  %v134 = vld [vmem:[%s3 + $0x78] sm:$0xff]
  %v135 = vld [vmem:[%s3 + $0x80] sm:$0x7]
  %v136 = vld [vmem:[%s3 + $0x88] sm:$0x7]
  %v137 = vld [vmem:[%s3 + $0x90] sm:$0x7]
  %v138 = vld [vmem:[%s3 + $0x98] sm:$0x7]
  %v139 = vld [vmem:[%s3 + $0xa0] sm:$0x7]
  %v140 = vld [vmem:[%s3 + $0xa8] sm:$0x7]
  %v141 = vld [vmem:[%s3 + $0xb0] sm:$0x7]
  %v142 = vld [vmem:[%s3 + $0xb8] sm:$0x7]
  %v143 = vmul.f32 %v95, %v119
  %v144 = vmul.f32 %v96, %v120
  %v145 = vmul.f32 %v97, %v121
  %v146 = vmul.f32 %v98, %v122
  %v147 = vmul.f32 %v99, %v123
  %v148 = vmul.f32 %v100, %v124
  %v149 = vmul.f32 %v101, %v125
  %v150 = vmul.f32 %v102, %v126
  %v151 = vmul.f32 %v103, %v127
  %v152 = vmul.f32 %v104, %v128
  %v153 = vmul.f32 %v105, %v129
  %v154 = vmul.f32 %v106, %v130
  %v155 = vmul.f32 %v107, %v131
  %v156 = vmul.f32 %v108, %v132
  %v157 = vmul.f32 %v109, %v133
  %v158 = vmul.f32 %v110, %v134
  %v159 = vmul.f32 %v111, %v135
  %v160 = vmul.f32 %v112, %v136
  %v161 = vmul.f32 %v113, %v137
  %v162 = vmul.f32 %v114, %v138
  %v163 = vmul.f32 %v115, %v139
  %v164 = vmul.f32 %v116, %v140
  %v165 = vmul.f32 %v117, %v141
  %v166 = vmul.f32 %v118, %v142
  %v167 = vmul.f32 %v143, 1.442695
  %v168 = vpow.pop %v167
  %v169 = vmul.f32 %v144, 1.442695
  %v170 = vpow.pop %v169
  %v171 = vmul.f32 %v145, 1.442695
  %v172 = vpow.pop %v171
  %v173 = vmul.f32 %v146, 1.442695
  %v174 = vpow.pop %v173
  %v175 = vmul.f32 %v147, 1.442695
  %v176 = vpow.pop %v175
  %v177 = vmul.f32 %v148, 1.442695
  %v178 = vpow.pop %v177
  %v179 = vmul.f32 %v149, 1.442695
  %v180 = vpow.pop %v179
  %v181 = vmul.f32 %v150, 1.442695
  %v182 = vpow.pop %v181
  %v183 = vmul.f32 %v151, 1.442695
  %v184 = vpow.pop %v183
  %v185 = vmul.f32 %v152, 1.442695
  %v186 = vpow.pop %v185
  %v187 = vmul.f32 %v153, 1.442695
  %v188 = vpow.pop %v187
  %v189 = vmul.f32 %v154, 1.442695
  %v190 = vpow.pop %v189
  %v191 = vmul.f32 %v155, 1.442695
  %v192 = vpow.pop %v191
  %v193 = vmul.f32 %v156, 1.442695
  %v194 = vpow.pop %v193
  %v195 = vmul.f32 %v157, 1.442695
  %v196 = vpow.pop %v195
  %v197 = vmul.f32 %v158, 1.442695
  %v198 = vpow.pop %v197
  %v199 = vmul.f32 %v159, 1.442695
  %v200 = vpow.pop %v199
  %v201 = vmul.f32 %v160, 1.442695
  %v202 = vpow.pop %v201
  %v203 = vmul.f32 %v161, 1.442695
  %v204 = vpow.pop %v203
  %v205 = vmul.f32 %v162, 1.442695
  %v206 = vpow.pop %v205
  %v207 = vmul.f32 %v163, 1.442695
  %v208 = vpow.pop %v207
  %v209 = vmul.f32 %v164, 1.442695
  %v210 = vpow.pop %v209
  %v211 = vmul.f32 %v165, 1.442695
  %v212 = vpow.pop %v211
  %v213 = vmul.f32 %v166, 1.442695
  %v214 = vpow.pop %v213
  %v215 = vsub.f32 %v23, 1e-08
  %v216 = vsub.f32 %v24, 1e-08
  %v217 = vsub.f32 %v25, 1e-08
  %v218 = vsub.f32 %v26, 1e-08
  %v219 = vsub.f32 %v27, 1e-08
  %v220 = vsub.f32 %v28, 1e-08
  %v221 = vsub.f32 %v29, 1e-08
  %v222 = vsub.f32 %v30, 1e-08
  %v223 = vsub.f32 %v31, 1e-08
  %v224 = vsub.f32 %v32, 1e-08
  %v225 = vsub.f32 %v33, 1e-08
  %v226 = vsub.f32 %v34, 1e-08
  %v227 = vsub.f32 %v35, 1e-08
  %v228 = vsub.f32 %v36, 1e-08
  %v229 = vsub.f32 %v37, 1e-08
  %v230 = vsub.f32 %v38, 1e-08
  %v231 = vsub.f32 %v39, 1e-08
  %v232 = vsub.f32 %v40, 1e-08
  %v233 = vsub.f32 %v41, 1e-08
  %v234 = vsub.f32 %v42, 1e-08
  %v235 = vsub.f32 %v43, 1e-08
  %v236 = vsub.f32 %v44, 1e-08
  %v237 = vsub.f32 %v45, 1e-08
  %v238 = vsub.f32 %v46, 1e-08
  %v239 = vmax.f32 %v215, 0.0
  %v240 = vmax.f32 %v216, 0.0
  %v241 = vmax.f32 %v217, 0.0
  %v242 = vmax.f32 %v218, 0.0
  %v243 = vmax.f32 %v219, 0.0
  %v244 = vmax.f32 %v220, 0.0
  %v245 = vmax.f32 %v221, 0.0
  %v246 = vmax.f32 %v222, 0.0
  %v247 = vmax.f32 %v223, 0.0
  %v248 = vmax.f32 %v224, 0.0
  %v249 = vmax.f32 %v225, 0.0
  %v250 = vmax.f32 %v226, 0.0
  %v251 = vmax.f32 %v227, 0.0
  %v252 = vmax.f32 %v228, 0.0
  %v253 = vmax.f32 %v229, 0.0
  %v254 = vmax.f32 %v230, 0.0
  %v255 = vmax.f32 %v231, 0.0
  %v256 = vmax.f32 %v232, 0.0
  %v257 = vmax.f32 %v233, 0.0
  %v258 = vmax.f32 %v234, 0.0
  %v259 = vmax.f32 %v235, 0.0
  %v260 = vmax.f32 %v236, 0.0
  %v261 = vmax.f32 %v237, 0.0
  %v262 = vmax.f32 %v238, 0.0
  %v263 = vmin.f32 %v239, 1.0
  %v264 = vmin.f32 %v240, 1.0
  %v265 = vmin.f32 %v241, 1.0
  %v266 = vmin.f32 %v242, 1.0
  %v267 = vmin.f32 %v243, 1.0
  %v268 = vmin.f32 %v244, 1.0
  %v269 = vmin.f32 %v245, 1.0
  %v270 = vmin.f32 %v246, 1.0
  %v271 = vmin.f32 %v247, 1.0
  %v272 = vmin.f32 %v248, 1.0
  %v273 = vmin.f32 %v249, 1.0
  %v274 = vmin.f32 %v250, 1.0
  %v275 = vmin.f32 %v251, 1.0
  %v276 = vmin.f32 %v252, 1.0
  %v277 = vmin.f32 %v253, 1.0
  %v278 = vmin.f32 %v254, 1.0
  %v279 = vmin.f32 %v255, 1.0
  %v280 = vmin.f32 %v256, 1.0
  %v281 = vmin.f32 %v257, 1.0
  %v282 = vmin.f32 %v258, 1.0
  %v283 = vmin.f32 %v259, 1.0
  %v284 = vmin.f32 %v260, 1.0
  %v285 = vmin.f32 %v261, 1.0
  %v286 = vmin.f32 %v262, 1.0
  %v287 = vsub.f32 0.0, %v263
  %v288 = vsub.f32 0.0, %v264
  %v289 = vsub.f32 0.0, %v265
  %v290 = vsub.f32 0.0, %v266
  %v291 = vsub.f32 0.0, %v267
  %v292 = vsub.f32 0.0, %v268
  %v293 = vsub.f32 0.0, %v269
  %v294 = vsub.f32 0.0, %v270
  %v295 = vsub.f32 0.0, %v271
  %v296 = vsub.f32 0.0, %v272
  %v297 = vsub.f32 0.0, %v273
  %v298 = vsub.f32 0.0, %v274
  %v299 = vsub.f32 0.0, %v275
  %v300 = vsub.f32 0.0, %v276
  %v301 = vsub.f32 0.0, %v277
  %v302 = vsub.f32 0.0, %v278
  %v303 = vsub.f32 0.0, %v279
  %v304 = vsub.f32 0.0, %v280
  %v305 = vsub.f32 0.0, %v281
  %v306 = vsub.f32 0.0, %v282
  %v307 = vsub.f32 0.0, %v283
  %v308 = vsub.f32 0.0, %v284
  %v309 = vsub.f32 0.0, %v285
  %v310 = vsub.f32 0.0, %v286
  %v311 = vmul.f32 %v287, 10.0
  %v312 = vmul.f32 %v288, 10.0
  %v313 = vmul.f32 %v289, 10.0
  %v314 = vmul.f32 %v290, 10.0
  %v315 = vmul.f32 %v291, 10.0
  %v316 = vmul.f32 %v292, 10.0
  %v317 = vmul.f32 %v293, 10.0
  %v318 = vmul.f32 %v294, 10.0
  %v319 = vmul.f32 %v295, 10.0
  %v320 = vmul.f32 %v296, 10.0
  %v321 = vmul.f32 %v297, 10.0
  %v322 = vmul.f32 %v298, 10.0
  %v323 = vmul.f32 %v299, 10.0
  %v324 = vmul.f32 %v300, 10.0
  %v325 = vmul.f32 %v301, 10.0
  %v326 = vmul.f32 %v302, 10.0
  %v327 = vmul.f32 %v303, 10.0
  %v328 = vmul.f32 %v304, 10.0
  %v329 = vmul.f32 %v305, 10.0
  %v330 = vmul.f32 %v306, 10.0
  %v331 = vmul.f32 %v307, 10.0
  %v332 = vmul.f32 %v308, 10.0
  %v333 = vmul.f32 %v309, 10.0
  %v334 = vmul.f32 %v310, 10.0
  %v335 = vlaneseq
  %v336 = vshrl.u32 %v335, 7
  %v337 = vadd.s32 %v336, 8
  %v338 = vadd.s32 %v336, 16
  %vm339 = vcmp.lt.s32.totalorder %v336, 18
  %vm340 = vcmp.lt.s32.totalorder %v337, 18
  %vm341 = vcmp.lt.s32.totalorder %v338, 18
  %v342 = vsel %vm339, %v168, %v311
  %v343 = vsel %vm339, %v170, %v312
  %v344 = vsel %vm339, %v172, %v313
  %v345 = vsel %vm339, %v174, %v314
  %v346 = vsel %vm339, %v176, %v315
  %v347 = vsel %vm339, %v178, %v316
  %v348 = vsel %vm339, %v180, %v317
  %v349 = vsel %vm339, %v182, %v318
  %v350 = vsel %vm340, %v184, %v319
  %v351 = vsel %vm340, %v186, %v320
  %v352 = vsel %vm340, %v188, %v321
  %v353 = vsel %vm340, %v190, %v322
  %v354 = vsel %vm340, %v192, %v323
  %v355 = vsel %vm340, %v194, %v324
  %v356 = vsel %vm340, %v196, %v325
  %v357 = vsel %vm340, %v198, %v326
  %v358 = vsel %vm341, %v200, %v327
  %v359 = vsel %vm341, %v202, %v328
  %v360 = vsel %vm341, %v204, %v329
  %v361 = vsel %vm341, %v206, %v330
  %v362 = vsel %vm341, %v208, %v331
  %v363 = vsel %vm341, %v210, %v332
  %v364 = vsel %vm341, %v212, %v333
  %v365 = vsel %vm341, %v214, %v334
  %v366 = vld [vmem:[%s4] sm:$0xf]
  %vm367 = vcmask 154624
  %v369 = vsel %vm367, %v366, 0
  %vm371 = vcmask 1042432
  %v373 = vsel %vm371, %v358, 0
  %v376 = vsel %vm371, %v359, 0
  %v379 = vsel %vm371, %v360, 0
  %v382 = vsel %vm371, %v361, 0
  %v385 = vsel %vm371, %v362, 0
  %v388 = vsel %vm371, %v363, 0
  %v391 = vsel %vm371, %v364, 0
  %v394 = vsel %vm371, %v365, 0
  %396 = vmatprep.subr.mxu0 0.0
  %397 = vmatpush1.msra.mxu0 0.0
  %398 = vmatprep.subr.mxu0 0.0
  %399 = vmatpush1.msra.mxu0 0.0
  %400 = vmatprep.subr.mxu0 0.0
  %401 = vmatpush1.msra.mxu0 0.0
  %402 = vmatprep.subr.mxu0 0.0
  %403 = vmatpush1.msra.mxu0 0.0
  %404 = vmatprep.subr.mxu0 0.0
  %405 = vmatpush1.msra.mxu0 0.0
  %406 = vmatprep.subr.mxu0 0.0
  %407 = vmatpush1.msra.mxu0 0.0
  %408 = vmatprep.subr.mxu0 0.0
  %409 = vmatpush1.msra.mxu0 0.0
  %410 = vmatprep.subr.mxu0 0.0
  %411 = vmatpush1.msra.mxu0 0.0
  %412 = vmatprep.subr.mxu0 0.0
  %413 = vmatpush1.msra.mxu0 0.0
  %414 = vmatprep.subr.mxu0 0.0
  %415 = vmatpush1.msra.mxu0 0.0
  %416 = vmatprep.subr.mxu0 0.0
  %417 = vmatpush1.msra.mxu0 0.0
  %418 = vmatprep.subr.mxu0 0.0
  %419 = vmatpush1.msra.mxu0 0.0
  %420 = vmatprep.subr.mxu0 0.0
  %421 = vmatpush1.msra.mxu0 0.0
  %422 = vmatprep.subr.mxu0 %v376
  %423 = vmatpush1.msra.mxu0 %v373
  %424 = vmatprep.subr.mxu0 %v351
  %425 = vmatpush1.msra.mxu0 %v350
  %426 = vmatprep.subr.mxu0 %v343
  %427 = vmatpush1.msra.mxu0 %v342
  %428 = vmatprep.subr.mxu0 0.0
  %429 = vmatpush2.msra.mxu0 0.0
  %430 = vmatprep.subr.mxu0 0.0
  %431 = vmatpush2.msra.mxu0 0.0
  %432 = vmatprep.subr.mxu0 0.0
  %433 = vmatpush2.msra.mxu0 0.0
  %434 = vmatprep.subr.mxu0 0.0
  %435 = vmatpush2.msra.mxu0 0.0
  %436 = vmatprep.subr.mxu0 0.0
  %437 = vmatpush2.msra.mxu0 0.0
  %438 = vmatprep.subr.mxu0 0.0
  %439 = vmatpush2.msra.mxu0 0.0
  %440 = vmatprep.subr.mxu0 0.0
  %441 = vmatpush2.msra.mxu0 0.0
  %442 = vmatprep.subr.mxu0 0.0
  %443 = vmatpush2.msra.mxu0 0.0
  %444 = vmatprep.subr.mxu0 0.0
  %445 = vmatpush2.msra.mxu0 0.0
  %446 = vmatprep.subr.mxu0 0.0
  %447 = vmatpush2.msra.mxu0 0.0
  %448 = vmatprep.subr.mxu0 0.0
  %449 = vmatpush2.msra.mxu0 0.0
  %450 = vmatprep.subr.mxu0 0.0
  %451 = vmatpush2.msra.mxu0 0.0
  %452 = vmatprep.subr.mxu0 0.0
  %453 = vmatpush2.msra.mxu0 0.0
  %454 = vmatprep.subr.mxu0 0.0
  %455 = vmatpush2.msra.mxu0 0.0
  %456 = vmatprep.subr.mxu0 0.0
  %457 = vmatpush2.msra.mxu0 0.0
  %458 = vmatprep.subr.mxu0 0.0
  %459 = vmatpush2.msra.mxu0 0.0
  %460 = vmatprep.mubr.f32.mxu0 0.0
  %461 = vmatmul.mubr.f32.gmra.mxu0 %v369
  %v462 = vpop.f32.mrf.mxu0
  %v463 = vadd.f32 0.0, %v462
  %v464 = vpop.f32.mrf.mxu0
  %v465 = vadd.f32 0.0, %v464
  %466 = vdwg.mxu0
  %467 = vmatprep.subr.mxu0 0.0
  %468 = vmatpush1.msra.mxu0 0.0
  %469 = vmatprep.subr.mxu0 0.0
  %470 = vmatpush1.msra.mxu0 0.0
  %471 = vmatprep.subr.mxu0 0.0
  %472 = vmatpush1.msra.mxu0 0.0
  %473 = vmatprep.subr.mxu0 0.0
  %474 = vmatpush1.msra.mxu0 0.0
  %475 = vmatprep.subr.mxu0 0.0
  %476 = vmatpush1.msra.mxu0 0.0
  %477 = vmatprep.subr.mxu0 0.0
  %478 = vmatpush1.msra.mxu0 0.0
  %479 = vmatprep.subr.mxu0 0.0
  %480 = vmatpush1.msra.mxu0 0.0
  %481 = vmatprep.subr.mxu0 0.0
  %482 = vmatpush1.msra.mxu0 0.0
  %483 = vmatprep.subr.mxu0 0.0
  %484 = vmatpush1.msra.mxu0 0.0
  %485 = vmatprep.subr.mxu0 0.0
  %486 = vmatpush1.msra.mxu0 0.0
  %487 = vmatprep.subr.mxu0 0.0
  %488 = vmatpush1.msra.mxu0 0.0
  %489 = vmatprep.subr.mxu0 0.0
  %490 = vmatpush1.msra.mxu0 0.0
  %491 = vmatprep.subr.mxu0 0.0
  %492 = vmatpush1.msra.mxu0 0.0
  %493 = vmatprep.subr.mxu0 %v382
  %494 = vmatpush1.msra.mxu0 %v379
  %495 = vmatprep.subr.mxu0 %v353
  %496 = vmatpush1.msra.mxu0 %v352
  %497 = vmatprep.subr.mxu0 %v345
  %498 = vmatpush1.msra.mxu0 %v344
  %499 = vmatprep.subr.mxu0 0.0
  %500 = vmatpush2.msra.mxu0 0.0
  %501 = vmatprep.subr.mxu0 0.0
  %502 = vmatpush2.msra.mxu0 0.0
  %503 = vmatprep.subr.mxu0 0.0
  %504 = vmatpush2.msra.mxu0 0.0
  %505 = vmatprep.subr.mxu0 0.0
  %506 = vmatpush2.msra.mxu0 0.0
  %507 = vmatprep.subr.mxu0 0.0
  %508 = vmatpush2.msra.mxu0 0.0
  %509 = vmatprep.subr.mxu0 0.0
  %510 = vmatpush2.msra.mxu0 0.0
  %511 = vmatprep.subr.mxu0 0.0
  %512 = vmatpush2.msra.mxu0 0.0
  %513 = vmatprep.subr.mxu0 0.0
  %514 = vmatpush2.msra.mxu0 0.0
  %515 = vmatprep.subr.mxu0 0.0
  %516 = vmatpush2.msra.mxu0 0.0
  %517 = vmatprep.subr.mxu0 0.0
  %518 = vmatpush2.msra.mxu0 0.0
  %519 = vmatprep.subr.mxu0 0.0
  %520 = vmatpush2.msra.mxu0 0.0
  %521 = vmatprep.subr.mxu0 0.0
  %522 = vmatpush2.msra.mxu0 0.0
  %523 = vmatprep.subr.mxu0 0.0
  %524 = vmatpush2.msra.mxu0 0.0
  %525 = vmatprep.subr.mxu0 0.0
  %526 = vmatpush2.msra.mxu0 0.0
  %527 = vmatprep.subr.mxu0 0.0
  %528 = vmatpush2.msra.mxu0 0.0
  %529 = vmatprep.subr.mxu0 0.0
  %530 = vmatpush2.msra.mxu0 0.0
  %531 = vmatprep.mubr.f32.mxu0 0.0
  %532 = vmatmul.mubr.f32.gmra.mxu0 %v369
  %v533 = vpop.f32.mrf.mxu0
  %v534 = vadd.f32 0.0, %v533
  %v535 = vpop.f32.mrf.mxu0
  %v536 = vadd.f32 0.0, %v535
  %537 = vdwg.mxu0
  %538 = vmatprep.subr.mxu0 0.0
  %539 = vmatpush1.msra.mxu0 0.0
  %540 = vmatprep.subr.mxu0 0.0
  %541 = vmatpush1.msra.mxu0 0.0
  %542 = vmatprep.subr.mxu0 0.0
  %543 = vmatpush1.msra.mxu0 0.0
  %544 = vmatprep.subr.mxu0 0.0
  %545 = vmatpush1.msra.mxu0 0.0
  %546 = vmatprep.subr.mxu0 0.0
  %547 = vmatpush1.msra.mxu0 0.0
  %548 = vmatprep.subr.mxu0 0.0
  %549 = vmatpush1.msra.mxu0 0.0
  %550 = vmatprep.subr.mxu0 0.0
  %551 = vmatpush1.msra.mxu0 0.0
  %552 = vmatprep.subr.mxu0 0.0
  %553 = vmatpush1.msra.mxu0 0.0
  %554 = vmatprep.subr.mxu0 0.0
  %555 = vmatpush1.msra.mxu0 0.0
  %556 = vmatprep.subr.mxu0 0.0
  %557 = vmatpush1.msra.mxu0 0.0
  %558 = vmatprep.subr.mxu0 0.0
  %559 = vmatpush1.msra.mxu0 0.0
  %560 = vmatprep.subr.mxu0 0.0
  %561 = vmatpush1.msra.mxu0 0.0
  %562 = vmatprep.subr.mxu0 0.0
  %563 = vmatpush1.msra.mxu0 0.0
  %564 = vmatprep.subr.mxu0 %v388
  %565 = vmatpush1.msra.mxu0 %v385
  %566 = vmatprep.subr.mxu0 %v355
  %567 = vmatpush1.msra.mxu0 %v354
  %568 = vmatprep.subr.mxu0 %v347
  %569 = vmatpush1.msra.mxu0 %v346
  %570 = vmatprep.subr.mxu0 0.0
  %571 = vmatpush2.msra.mxu0 0.0
  %572 = vmatprep.subr.mxu0 0.0
  %573 = vmatpush2.msra.mxu0 0.0
  %574 = vmatprep.subr.mxu0 0.0
  %575 = vmatpush2.msra.mxu0 0.0
  %576 = vmatprep.subr.mxu0 0.0
  %577 = vmatpush2.msra.mxu0 0.0
  %578 = vmatprep.subr.mxu0 0.0
  %579 = vmatpush2.msra.mxu0 0.0
  %580 = vmatprep.subr.mxu0 0.0
  %581 = vmatpush2.msra.mxu0 0.0
  %582 = vmatprep.subr.mxu0 0.0
  %583 = vmatpush2.msra.mxu0 0.0
  %584 = vmatprep.subr.mxu0 0.0
  %585 = vmatpush2.msra.mxu0 0.0
  %586 = vmatprep.subr.mxu0 0.0
  %587 = vmatpush2.msra.mxu0 0.0
  %588 = vmatprep.subr.mxu0 0.0
  %589 = vmatpush2.msra.mxu0 0.0
  %590 = vmatprep.subr.mxu0 0.0
  %591 = vmatpush2.msra.mxu0 0.0
  %592 = vmatprep.subr.mxu0 0.0
  %593 = vmatpush2.msra.mxu0 0.0
  %594 = vmatprep.subr.mxu0 0.0
  %595 = vmatpush2.msra.mxu0 0.0
  %596 = vmatprep.subr.mxu0 0.0
  %597 = vmatpush2.msra.mxu0 0.0
  %598 = vmatprep.subr.mxu0 0.0
  %599 = vmatpush2.msra.mxu0 0.0
  %600 = vmatprep.subr.mxu0 0.0
  %601 = vmatpush2.msra.mxu0 0.0
  %602 = vmatprep.mubr.f32.mxu0 0.0
  %603 = vmatmul.mubr.f32.gmra.mxu0 %v369
  %v604 = vpop.f32.mrf.mxu0
  %v605 = vadd.f32 0.0, %v604
  %v606 = vpop.f32.mrf.mxu0
  %v607 = vadd.f32 0.0, %v606
  %608 = vdwg.mxu0
  %609 = vmatprep.subr.mxu0 0.0
  %610 = vmatpush1.msra.mxu0 0.0
  %611 = vmatprep.subr.mxu0 0.0
  %612 = vmatpush1.msra.mxu0 0.0
  %613 = vmatprep.subr.mxu0 0.0
  %614 = vmatpush1.msra.mxu0 0.0
  %615 = vmatprep.subr.mxu0 0.0
  %616 = vmatpush1.msra.mxu0 0.0
  %617 = vmatprep.subr.mxu0 0.0
  %618 = vmatpush1.msra.mxu0 0.0
  %619 = vmatprep.subr.mxu0 0.0
  %620 = vmatpush1.msra.mxu0 0.0
  %621 = vmatprep.subr.mxu0 0.0
  %622 = vmatpush1.msra.mxu0 0.0
  %623 = vmatprep.subr.mxu0 0.0
  %624 = vmatpush1.msra.mxu0 0.0
  %625 = vmatprep.subr.mxu0 0.0
  %626 = vmatpush1.msra.mxu0 0.0
  %627 = vmatprep.subr.mxu0 0.0
  %628 = vmatpush1.msra.mxu0 0.0
  %629 = vmatprep.subr.mxu0 0.0
  %630 = vmatpush1.msra.mxu0 0.0
  %631 = vmatprep.subr.mxu0 0.0
  %632 = vmatpush1.msra.mxu0 0.0
  %633 = vmatprep.subr.mxu0 0.0
  %634 = vmatpush1.msra.mxu0 0.0
  %635 = vmatprep.subr.mxu0 %v394
  %636 = vmatpush1.msra.mxu0 %v391
  %637 = vmatprep.subr.mxu0 %v357
  %638 = vmatpush1.msra.mxu0 %v356
  %639 = vmatprep.subr.mxu0 %v349
  %640 = vmatpush1.msra.mxu0 %v348
  %641 = vmatprep.subr.mxu0 0.0
  %642 = vmatpush2.msra.mxu0 0.0
  %643 = vmatprep.subr.mxu0 0.0
  %644 = vmatpush2.msra.mxu0 0.0
  %645 = vmatprep.subr.mxu0 0.0
  %646 = vmatpush2.msra.mxu0 0.0
  %647 = vmatprep.subr.mxu0 0.0
  %648 = vmatpush2.msra.mxu0 0.0
  %649 = vmatprep.subr.mxu0 0.0
  %650 = vmatpush2.msra.mxu0 0.0
  %651 = vmatprep.subr.mxu0 0.0
  %652 = vmatpush2.msra.mxu0 0.0
  %653 = vmatprep.subr.mxu0 0.0
  %654 = vmatpush2.msra.mxu0 0.0
  %655 = vmatprep.subr.mxu0 0.0
  %656 = vmatpush2.msra.mxu0 0.0
  %657 = vmatprep.subr.mxu0 0.0
  %658 = vmatpush2.msra.mxu0 0.0
  %659 = vmatprep.subr.mxu0 0.0
  %660 = vmatpush2.msra.mxu0 0.0
  %661 = vmatprep.subr.mxu0 0.0
  %662 = vmatpush2.msra.mxu0 0.0
  %663 = vmatprep.subr.mxu0 0.0
  %664 = vmatpush2.msra.mxu0 0.0
  %665 = vmatprep.subr.mxu0 0.0
  %666 = vmatpush2.msra.mxu0 0.0
  %667 = vmatprep.subr.mxu0 0.0
  %668 = vmatpush2.msra.mxu0 0.0
  %669 = vmatprep.subr.mxu0 0.0
  %670 = vmatpush2.msra.mxu0 0.0
  %671 = vmatprep.subr.mxu0 0.0
  %672 = vmatpush2.msra.mxu0 0.0
  %673 = vmatprep.mubr.f32.mxu0 0.0
  %674 = vmatmul.mubr.f32.gmra.mxu0 %v369
  %v675 = vpop.f32.mrf.mxu0
  %v676 = vadd.f32 0.0, %v675
  %v677 = vpop.f32.mrf.mxu0
  %v678 = vadd.f32 0.0, %v677
  %679 = vdwg.mxu0
  %v680 = vld [vmem:[%s1] sm:$0xff]
  %v681 = vld [vmem:[%s1 + $0x8] sm:$0xff]
  %v682 = vld [vmem:[%s1 + $0x10] sm:$0xff]
  %v683 = vld [vmem:[%s1 + $0x18] sm:$0xff]
  %v692 = vcombine.low %v463, %v465
  %v693 = vcombine.low %v534, %v536
  %v694 = vcombine.low %v605, %v607
  %v695 = vcombine.low %v676, %v678
  %v700 = vadd.f32 %v680, %v692
  %v701 = vadd.f32 %v681, %v693
  %v702 = vadd.f32 %v682, %v694
  %v703 = vadd.f32 %v683, %v695
  %v704 = vld [vmem:[%s5] sm:$0xff]
  %v705 = vld [vmem:[%s5 + $0x8] sm:$0xff]
  %v706 = vld [vmem:[%s5 + $0x10] sm:$0xff]
  %v707 = vld [vmem:[%s5 + $0x18] sm:$0xff]
  %v708 = vadd.f32 %v700, %v704
  %v709 = vadd.f32 %v701, %v705
  %v710 = vadd.f32 %v702, %v706
  %v711 = vadd.f32 %v703, %v707
  %v712 = vmax.f32 %v708, 0.0
  %v713 = vmax.f32 %v709, 0.0
  %v714 = vmax.f32 %v710, 0.0
  %v715 = vmax.f32 %v711, 0.0
  %v716 = vmin.f32 %v712, 1.0
  %v717 = vmin.f32 %v713, 1.0
  %v718 = vmin.f32 %v714, 1.0
  %v719 = vmin.f32 %v715, 1.0
  %720 = vst [vmem:[%s6] sm:$0xff] %v716
  %721 = vst [vmem:[%s6 + $0x8] sm:$0xff] %v717
  %722 = vst [vmem:[%s6 + $0x10] sm:$0xff] %v718
  %723 = vst [vmem:[%s6 + $0x18] sm:$0xff] %v719
  // Predicated region
  $region26: #{lenia_forward.3} parent=0 // pred_check
    _
  $region27: #{lenia_forward.3} parent=0 // pred_check_branch
    %725 = sbr.rel (0) target = $region29
  $region28: #{lenia_forward.3} parent=0 // pred_region
    _
  $region29: #{lenia_forward.3} parent=0 // pred_fallthru
    _
  // Predicated region
  $region30: #{lenia_forward.3} parent=0 // pred_check
    _
  $region31: #{lenia_forward.3} parent=0 // pred_check_branch
    %727 = sbr.rel (0) target = $region33
  $region32: #{lenia_forward.3} parent=0 // pred_region
    _
  $region33: #{lenia_forward.3} parent=0 // pred_fallthru
    _

</llo_original>
